<compile_context>
chip_gen: v7x
topology: tpu7x:2x2x1
jax: 0.10.0
libtpu: 0.0.40
codegen_flags: <defaults>
</compile_context>

<pallas_src>
import functools
import math

import jax
import jax.numpy as jnp
from jax import lax
from jax.experimental import pallas as pl
from jax.experimental.pallas import tpu as pltpu


def attention_kernel(y_ref, vec_ref, wqkv_ref, wmsa_ref, wa1_ref, wa2_ref,
                     out_ref, *, batch, seq, num_head, dim_head, eps):
    # y_ref:    (B*S, E)  f32, batch folded into rows
    # vec_ref:  (5, 3E)   f32, rows = [ln_g, ln_b, b_qkv(scaled), b_a1, b_a2]
    # wqkv_ref: (3E, E)   bf16, PyTorch (out_features, in_features) layout,
    #                     Q rows pre-scaled by 1/sqrt(Dh)
    # wmsa_ref: (E, E) bf16; wa1_ref: (r, E) bf16; wa2_ref: (E, r) bf16
    M, E = y_ref.shape
    r = wa1_ref.shape[0]
    f32 = jnp.float32
    bf16 = jnp.bfloat16

    # -------- unpack packed small vectors (lane-offset-0 row slices, free) ----
    ln_g = vec_ref[0:1, 0:E]
    ln_b = vec_ref[1:2, 0:E]
    b_qkv = vec_ref[2:3, :]
    b_a1 = vec_ref[3:4, 0:r]
    b_a2 = vec_ref[4:5, 0:E]

    # -------- LayerNorm over E, all B*S rows at once (f32 VPU) ---------------
    x = y_ref[...].astype(f32)
    mean = jnp.mean(x, axis=-1, keepdims=True)
    cent = x - mean
    var = jnp.mean(cent * cent, axis=-1, keepdims=True)
    x_ln = cent * lax.rsqrt(var + eps) * ln_g + ln_b

    # -------- QKV projection: one (M, E) @ (E, 3E) bf16 MXU matmul -----------
    qkv = lax.dot_general(x_ln.astype(bf16), wqkv_ref[...],
                          (((1,), (1,)), ((), ())),
                          preferred_element_type=f32) + b_qkv        # (M, 3E)

    # full-width Q/K/V views hoisted once (no per-head 8-lane slicing)
    q_all = qkv[:, 0:E]
    k_all = qkv[:, E:2 * E]
    v_all = qkv[:, 2 * E:3 * E]
    k_bf = k_all.astype(bf16)

    # -------- cross-batch block mask (batches merged per head) ---------------
    row = lax.broadcasted_iota(jnp.int32, (M, M), 0)
    col = lax.broadcasted_iota(jnp.int32, (M, M), 1)
    same = None
    for b in range(batch):
        rin = (row >= b * seq) & (row < (b + 1) * seq)
        cin = (col >= b * seq) & (col < (b + 1) * seq)
        blk = rin & cin
        same = blk if same is None else (same | blk)
    neg_mask = jnp.where(same, 0.0, -1e30).astype(f32)

    lane = lax.broadcasted_iota(jnp.int32, (1, E), 1)

    # -------- per-head attention over all B*S rows (trace-time unrolled) -----
    concat = None                                   # head-major concat (M, E) f32
    for h in range(num_head):
        hmask = ((lane >= h * dim_head) &
                 (lane < (h + 1) * dim_head)).astype(f32)             # (1, E)
        # masked-Q full-width contraction == Q_h @ K_h^T (scale already folded)
        qh = (q_all * hmask).astype(bf16)
        s = lax.dot_general(qh, k_bf, (((1,), (1,)), ((), ())),
                            preferred_element_type=f32)               # (M, M)
        s = s + neg_mask                            # kill cross-batch keys
        m = jnp.max(s, axis=-1, keepdims=True)
        e = jnp.exp(s - m)
        inv_l = pl.reciprocal(jnp.sum(e, axis=-1, keepdims=True), approx=True)
        # masked-V: PV result is (M, E) with only head-h lanes nonzero
        vh = (v_all * hmask).astype(bf16)
        o = lax.dot_general(e.astype(bf16), vh, (((1,), (0,)), ((), ())),
                            preferred_element_type=f32)               # (M, E)
        contrib = o * inv_l                         # deferred softmax normalize
        concat = contrib if concat is None else concat + contrib

    # -------- MSA projection (no bias) ----------------------------------------
    msa = lax.dot_general(concat.astype(bf16), wmsa_ref[...],
                          (((1,), (1,)), ((), ())),
                          preferred_element_type=f32)

    # -------- adapter MLP + residual (Residual(msa, a) = a + msa) -------------
    a1 = jnp.maximum(
        lax.dot_general(msa.astype(bf16), wa1_ref[...], (((1,), (1,)), ((), ())),
                        preferred_element_type=f32) + b_a1, 0.0)
    a2 = lax.dot_general(a1.astype(bf16), wa2_ref[...], (((1,), (1,)), ((), ())),
                         preferred_element_type=f32) + b_a2

    out_ref[...] = (msa + a2).astype(out_ref.dtype)


def attention_forward(y, ln_g, ln_b, w_qkv, b_qkv, w_msa, w_a1, b_a1, w_a2,
                      b_a2, *, num_head, dim_head):
    """y: (B, S, E); weights in PyTorch (out_features, in_features) layout.
    Returns (B, S, E)."""
    B, S, E = y.shape
    r = w_a1.shape[0]
    M = B * S
    inv_sc = 1.0 / math.sqrt(dim_head)

    # Fold the 1/sqrt(Dh) attention scale into the Q part of the QKV projection
    # (host-side constant fold; Q outputs are the first E rows of w_qkv).
    scale = jnp.concatenate([jnp.full((E,), inv_sc, jnp.float32),
                             jnp.ones((2 * E,), jnp.float32)])
    w_qkv_s = w_qkv * scale[:, None]
    b_qkv_s = b_qkv * scale

    # Pack the five small vectors into one (5, 3E) f32 array -> one input DMA.
    vecs = jnp.zeros((5, 3 * E), jnp.float32)
    vecs = vecs.at[0, :E].set(ln_g)
    vecs = vecs.at[1, :E].set(ln_b)
    vecs = vecs.at[2, :].set(b_qkv_s)
    vecs = vecs.at[3, :r].set(b_a1)
    vecs = vecs.at[4, :E].set(b_a2)

    kern = functools.partial(attention_kernel, batch=B, seq=S,
                             num_head=num_head, dim_head=dim_head, eps=1e-6)
    vmem = lambda: pl.BlockSpec(memory_space=pltpu.MemorySpace.VMEM)
    out_flat = pl.pallas_call(
        kern,
        out_shape=jax.ShapeDtypeStruct((M, E), y.dtype),
        in_specs=[vmem() for _ in range(6)],
        out_specs=vmem(),
    )(y.reshape(M, E), vecs,
      w_qkv_s.astype(jnp.bfloat16), w_msa.astype(jnp.bfloat16),
      w_a1.astype(jnp.bfloat16), w_a2.astype(jnp.bfloat16))
    return out_flat.reshape(B, S, E)


def attention_reference(y, ln_g, ln_b, w_qkv, b_qkv, w_msa, w_a1, b_a1, w_a2,
                        b_a2, *, num_head, dim_head):
    """Pure-JAX f32 reference mirroring the PyTorch forward."""
    B, S, E = y.shape
    mean = y.mean(-1, keepdims=True)
    var = ((y - mean) ** 2).mean(-1, keepdims=True)
    x = (y - mean) / jnp.sqrt(var + 1e-6) * ln_g + ln_b
    qkv = x @ w_qkv.T + b_qkv                                        # (B,S,3E)
    qkv = qkv.reshape(B, S, 3, num_head, dim_head).transpose(2, 0, 3, 1, 4)
    q, k, v = qkv[0], qkv[1], qkv[2]                                 # (B,H,S,Dh)
    s = jnp.einsum("bhsd,bhtd->bhst", q, k) / math.sqrt(dim_head)
    p = jax.nn.softmax(s, axis=-1)
    o = jnp.einsum("bhst,bhtd->bhsd", p, v)
    concat = o.transpose(0, 2, 1, 3).reshape(B, S, E)
    msa = concat @ w_msa.T
    a1 = jax.nn.relu(msa @ w_a1.T + b_a1)
    a2 = a1 @ w_a2.T + b_a2
    return msa + a2


if __name__ == "__main__":
    # Small shapes consistent with the module: num_patch=16 -> seq=17,
    # embedding_dim=32, num_head=4, dim_head=8, adapter rank r=8, batch=2.
    B = 2
    num_patch = 16
    num_head = 4
    embedding_dim = 32
    dim_head = embedding_dim // num_head
    r = 8
    S = num_patch + 1

    key = jax.random.PRNGKey(0)
    keys = jax.random.split(key, 10)
    y = jax.random.normal(keys[0], (B, S, embedding_dim), jnp.float32)
    ln_g = 1.0 + 0.1 * jax.random.normal(keys[1], (embedding_dim,), jnp.float32)
    ln_b = 0.1 * jax.random.normal(keys[2], (embedding_dim,), jnp.float32)
    w_qkv = 0.1 * jax.random.normal(keys[3], (3 * embedding_dim, embedding_dim), jnp.float32)
    b_qkv = 0.1 * jax.random.normal(keys[4], (3 * embedding_dim,), jnp.float32)
    w_msa = 0.1 * jax.random.normal(keys[5], (embedding_dim, embedding_dim), jnp.float32)
    w_a1 = 0.1 * jax.random.normal(keys[6], (r, embedding_dim), jnp.float32)
    b_a1 = 0.1 * jax.random.normal(keys[7], (r,), jnp.float32)
    w_a2 = 0.1 * jax.random.normal(keys[8], (embedding_dim, r), jnp.float32)
    b_a2 = 0.1 * jax.random.normal(keys[9], (embedding_dim,), jnp.float32)

    out = attention_forward(y, ln_g, ln_b, w_qkv, b_qkv, w_msa, w_a1, b_a1,
                            w_a2, b_a2, num_head=num_head, dim_head=dim_head)
    out = jax.block_until_ready(out)

    ref = attention_reference(y, ln_g, ln_b, w_qkv, b_qkv, w_msa, w_a1, b_a1,
                              w_a2, b_a2, num_head=num_head, dim_head=dim_head)
    assert out.shape == (B, S, embedding_dim)
    # bf16 MXU operands (f32 accumulation) -> looser tolerance than the f32 run.
    assert jnp.allclose(out, ref, atol=3e-2, rtol=3e-2), "mismatch vs pure-JAX reference"

    print("KERNEL_OK")
</pallas_src>

<mosaic_0001>
module attributes {stable_mosaic.version = 11 : i64} {
  func.func @attention_kernel(%arg0: memref<34x32xf32, #tpu.memory_space<vmem>>, %arg1: memref<5x96xf32, #tpu.memory_space<vmem>>, %arg2: memref<96x32xbf16, #tpu.memory_space<vmem>>, %arg3: memref<32x32xbf16, #tpu.memory_space<vmem>>, %arg4: memref<8x32xbf16, #tpu.memory_space<vmem>>, %arg5: memref<32x8xbf16, #tpu.memory_space<vmem>>, %arg6: memref<34x32xf32, #tpu.memory_space<vmem>>) attributes {dimension_semantics = [], scalar_prefetch = 0 : i64, scratch_operands = 0 : i64, tpu.core_type = #tpu.core_type<tc>} {
    %c0 = arith.constant 0 : index
    %c0_0 = arith.constant 0 : index
    %0 = vector.load %arg1[%c0, %c0_0] : memref<5x96xf32, #tpu.memory_space<vmem>>, vector<1x32xf32>
    %c1 = arith.constant 1 : index
    %c0_1 = arith.constant 0 : index
    %1 = vector.load %arg1[%c1, %c0_1] : memref<5x96xf32, #tpu.memory_space<vmem>>, vector<1x32xf32>
    %c2 = arith.constant 2 : index
    %c0_2 = arith.constant 0 : index
    %2 = vector.load %arg1[%c2, %c0_2] : memref<5x96xf32, #tpu.memory_space<vmem>>, vector<1x96xf32>
    %c3 = arith.constant 3 : index
    %c0_3 = arith.constant 0 : index
    %3 = vector.load %arg1[%c3, %c0_3] : memref<5x96xf32, #tpu.memory_space<vmem>>, vector<1x8xf32>
    %c4 = arith.constant 4 : index
    %c0_4 = arith.constant 0 : index
    %4 = vector.load %arg1[%c4, %c0_4] : memref<5x96xf32, #tpu.memory_space<vmem>>, vector<1x32xf32>
    %c0_5 = arith.constant 0 : index
    %c0_6 = arith.constant 0 : index
    %5 = vector.load %arg0[%c0_5, %c0_6] : memref<34x32xf32, #tpu.memory_space<vmem>>, vector<34x32xf32>
    %cst = arith.constant dense<0.000000e+00> : vector<34xf32>
    %6 = vector.multi_reduction <add>, %5, %cst [1] : vector<34x32xf32> to vector<34xf32>
    %7 = vector.shape_cast %6 : vector<34xf32> to vector<34x1xf32>
    %cst_7 = arith.constant 3.200000e+01 : f32
    %8 = vector.broadcast %cst_7 : f32 to vector<34x1xf32>
    %9 = arith.divf %7, %8 : vector<34x1xf32>
    %10 = vector.broadcast %9 : vector<34x1xf32> to vector<34x32xf32>
    %11 = arith.subf %5, %10 : vector<34x32xf32>
    %12 = arith.mulf %11, %11 : vector<34x32xf32>
    %cst_8 = arith.constant dense<0.000000e+00> : vector<34xf32>
    %13 = vector.multi_reduction <add>, %12, %cst_8 [1] : vector<34x32xf32> to vector<34xf32>
    %14 = vector.shape_cast %13 : vector<34xf32> to vector<34x1xf32>
    %cst_9 = arith.constant 3.200000e+01 : f32
    %15 = vector.broadcast %cst_9 : f32 to vector<34x1xf32>
    %16 = arith.divf %14, %15 : vector<34x1xf32>
    %cst_10 = arith.constant 9.99999997E-7 : f32
    %17 = vector.broadcast %cst_10 : f32 to vector<34x1xf32>
    %18 = arith.addf %16, %17 : vector<34x1xf32>
    %19 = math.rsqrt %18 : vector<34x1xf32>
    %20 = vector.broadcast %19 : vector<34x1xf32> to vector<34x32xf32>
    %21 = arith.mulf %11, %20 : vector<34x32xf32>
    %22 = vector.broadcast %0 : vector<1x32xf32> to vector<34x32xf32>
    %23 = arith.mulf %21, %22 : vector<34x32xf32>
    %24 = vector.broadcast %1 : vector<1x32xf32> to vector<34x32xf32>
    %25 = arith.addf %23, %24 : vector<34x32xf32>
    %26 = arith.truncf %25 : vector<34x32xf32> to vector<34x32xbf16>
    %c0_11 = arith.constant 0 : index
    %c0_12 = arith.constant 0 : index
    %27 = vector.load %arg2[%c0_11, %c0_12] : memref<96x32xbf16, #tpu.memory_space<vmem>>, vector<96x32xbf16>
    %cst_13 = arith.constant dense<0.000000e+00> : vector<34x96xf32>
    %28 = tpu.matmul %26, %27, %cst_13 {dimension_numbers = #tpu.dot_dimension_numbers<[1], [1], [0], [0], [0, 0, 1, 0], [], []>} : vector<34x32xbf16>, vector<96x32xbf16>, vector<34x96xf32> -> vector<34x96xf32>
    %29 = vector.broadcast %2 : vector<1x96xf32> to vector<34x96xf32>
    %30 = arith.addf %28, %29 : vector<34x96xf32>
    %31 = vector.extract_strided_slice %30 {offsets = [0, 0], sizes = [34, 32], strides = [1, 1]} : vector<34x96xf32> to vector<34x32xf32>
    %32 = vector.extract_strided_slice %30 {offsets = [0, 32], sizes = [34, 32], strides = [1, 1]} : vector<34x96xf32> to vector<34x32xf32>
    %33 = vector.extract_strided_slice %30 {offsets = [0, 64], sizes = [34, 32], strides = [1, 1]} : vector<34x96xf32> to vector<34x32xf32>
    %34 = arith.truncf %32 : vector<34x32xf32> to vector<34x32xbf16>
    %35 = tpu.iota {dimensions = array<i32: 0>} : vector<34x34xi32>
    %36 = tpu.iota {dimensions = array<i32: 1>} : vector<34x34xi32>
    %c0_i32 = arith.constant 0 : i32
    %37 = vector.broadcast %c0_i32 : i32 to vector<34x34xi32>
    %38 = arith.cmpi sge, %35, %37 : vector<34x34xi32>
    %c17_i32 = arith.constant 17 : i32
    %39 = vector.broadcast %c17_i32 : i32 to vector<34x34xi32>
    %40 = arith.cmpi slt, %35, %39 : vector<34x34xi32>
    %41 = arith.andi %38, %40 : vector<34x34xi1>
    %c0_i32_14 = arith.constant 0 : i32
    %42 = vector.broadcast %c0_i32_14 : i32 to vector<34x34xi32>
    %43 = arith.cmpi sge, %36, %42 : vector<34x34xi32>
    %c17_i32_15 = arith.constant 17 : i32
    %44 = vector.broadcast %c17_i32_15 : i32 to vector<34x34xi32>
    %45 = arith.cmpi slt, %36, %44 : vector<34x34xi32>
    %46 = arith.andi %43, %45 : vector<34x34xi1>
    %47 = arith.andi %41, %46 : vector<34x34xi1>
    %c17_i32_16 = arith.constant 17 : i32
    %48 = vector.broadcast %c17_i32_16 : i32 to vector<34x34xi32>
    %49 = arith.cmpi sge, %35, %48 : vector<34x34xi32>
    %c34_i32 = arith.constant 34 : i32
    %50 = vector.broadcast %c34_i32 : i32 to vector<34x34xi32>
    %51 = arith.cmpi slt, %35, %50 : vector<34x34xi32>
    %52 = arith.andi %49, %51 : vector<34x34xi1>
    %c17_i32_17 = arith.constant 17 : i32
    %53 = vector.broadcast %c17_i32_17 : i32 to vector<34x34xi32>
    %54 = arith.cmpi sge, %36, %53 : vector<34x34xi32>
    %c34_i32_18 = arith.constant 34 : i32
    %55 = vector.broadcast %c34_i32_18 : i32 to vector<34x34xi32>
    %56 = arith.cmpi slt, %36, %55 : vector<34x34xi32>
    %57 = arith.andi %54, %56 : vector<34x34xi1>
    %58 = arith.andi %52, %57 : vector<34x34xi1>
    %59 = arith.ori %47, %58 : vector<34x34xi1>
    %cst_19 = arith.constant 0.000000e+00 : f32
    %cst_20 = arith.constant -1.000000e+30 : f32
    %60 = vector.broadcast %cst_19 : f32 to vector<34x34xf32>
    %61 = vector.broadcast %cst_20 : f32 to vector<34x34xf32>
    %62 = arith.select %59, %60, %61 : vector<34x34xi1>, vector<34x34xf32>
    %63 = tpu.iota {dimensions = array<i32: 1>} : vector<1x32xi32>
    %c0_i32_21 = arith.constant 0 : i32
    %64 = vector.broadcast %c0_i32_21 : i32 to vector<1x32xi32>
    %65 = arith.cmpi sge, %63, %64 : vector<1x32xi32>
    %c8_i32 = arith.constant 8 : i32
    %66 = vector.broadcast %c8_i32 : i32 to vector<1x32xi32>
    %67 = arith.cmpi slt, %63, %66 : vector<1x32xi32>
    %68 = arith.andi %65, %67 : vector<1x32xi1>
    %69 = arith.extui %68 : vector<1x32xi1> to vector<1x32xi32>
    %70 = arith.sitofp %69 : vector<1x32xi32> to vector<1x32xf32>
    %71 = vector.broadcast %70 : vector<1x32xf32> to vector<34x32xf32>
    %72 = arith.mulf %31, %71 : vector<34x32xf32>
    %73 = arith.truncf %72 : vector<34x32xf32> to vector<34x32xbf16>
    %cst_22 = arith.constant dense<0.000000e+00> : vector<34x34xf32>
    %74 = tpu.matmul %73, %34, %cst_22 {dimension_numbers = #tpu.dot_dimension_numbers<[1], [1], [0], [0], [0, 0, 1, 0], [], []>} : vector<34x32xbf16>, vector<34x32xbf16>, vector<34x34xf32> -> vector<34x34xf32>
    %75 = arith.addf %74, %62 : vector<34x34xf32>
    %cst_23 = arith.constant dense<0xFF800000> : vector<34xf32>
    %76 = vector.multi_reduction <maximumf>, %75, %cst_23 [1] : vector<34x34xf32> to vector<34xf32>
    %77 = vector.shape_cast %76 : vector<34xf32> to vector<34x1xf32>
    %78 = vector.broadcast %77 : vector<34x1xf32> to vector<34x34xf32>
    %79 = arith.subf %75, %78 : vector<34x34xf32>
    %80 = math.exp %79 : vector<34x34xf32>
    %cst_24 = arith.constant dense<0.000000e+00> : vector<34xf32>
    %81 = vector.multi_reduction <add>, %80, %cst_24 [1] : vector<34x34xf32> to vector<34xf32>
    %82 = vector.shape_cast %81 : vector<34xf32> to vector<34x1xf32>
    %83 = tpu.reciprocal %82 {approx = true} : vector<34x1xf32> -> vector<34x1xf32>
    %84 = vector.broadcast %70 : vector<1x32xf32> to vector<34x32xf32>
    %85 = arith.mulf %33, %84 : vector<34x32xf32>
    %86 = arith.truncf %85 : vector<34x32xf32> to vector<34x32xbf16>
    %87 = arith.truncf %80 : vector<34x34xf32> to vector<34x34xbf16>
    %cst_25 = arith.constant dense<0.000000e+00> : vector<34x32xf32>
    %88 = tpu.matmul %87, %86, %cst_25 {dimension_numbers = #tpu.dot_dimension_numbers<[1], [0], [0], [1], [0, 0, 1, 1], [], []>} : vector<34x34xbf16>, vector<34x32xbf16>, vector<34x32xf32> -> vector<34x32xf32>
    %89 = vector.broadcast %83 : vector<34x1xf32> to vector<34x32xf32>
    %90 = arith.mulf %88, %89 : vector<34x32xf32>
    %c8_i32_26 = arith.constant 8 : i32
    %91 = vector.broadcast %c8_i32_26 : i32 to vector<1x32xi32>
    %92 = arith.cmpi sge, %63, %91 : vector<1x32xi32>
    %c16_i32 = arith.constant 16 : i32
    %93 = vector.broadcast %c16_i32 : i32 to vector<1x32xi32>
    %94 = arith.cmpi slt, %63, %93 : vector<1x32xi32>
    %95 = arith.andi %92, %94 : vector<1x32xi1>
    %96 = arith.extui %95 : vector<1x32xi1> to vector<1x32xi32>
    %97 = arith.sitofp %96 : vector<1x32xi32> to vector<1x32xf32>
    %98 = vector.broadcast %97 : vector<1x32xf32> to vector<34x32xf32>
    %99 = arith.mulf %31, %98 : vector<34x32xf32>
    %100 = arith.truncf %99 : vector<34x32xf32> to vector<34x32xbf16>
    %cst_27 = arith.constant dense<0.000000e+00> : vector<34x34xf32>
    %101 = tpu.matmul %100, %34, %cst_27 {dimension_numbers = #tpu.dot_dimension_numbers<[1], [1], [0], [0], [0, 0, 1, 0], [], []>} : vector<34x32xbf16>, vector<34x32xbf16>, vector<34x34xf32> -> vector<34x34xf32>
    %102 = arith.addf %101, %62 : vector<34x34xf32>
    %cst_28 = arith.constant dense<0xFF800000> : vector<34xf32>
    %103 = vector.multi_reduction <maximumf>, %102, %cst_28 [1] : vector<34x34xf32> to vector<34xf32>
    %104 = vector.shape_cast %103 : vector<34xf32> to vector<34x1xf32>
    %105 = vector.broadcast %104 : vector<34x1xf32> to vector<34x34xf32>
    %106 = arith.subf %102, %105 : vector<34x34xf32>
    %107 = math.exp %106 : vector<34x34xf32>
    %cst_29 = arith.constant dense<0.000000e+00> : vector<34xf32>
    %108 = vector.multi_reduction <add>, %107, %cst_29 [1] : vector<34x34xf32> to vector<34xf32>
    %109 = vector.shape_cast %108 : vector<34xf32> to vector<34x1xf32>
    %110 = tpu.reciprocal %109 {approx = true} : vector<34x1xf32> -> vector<34x1xf32>
    %111 = vector.broadcast %97 : vector<1x32xf32> to vector<34x32xf32>
    %112 = arith.mulf %33, %111 : vector<34x32xf32>
    %113 = arith.truncf %112 : vector<34x32xf32> to vector<34x32xbf16>
    %114 = arith.truncf %107 : vector<34x34xf32> to vector<34x34xbf16>
    %cst_30 = arith.constant dense<0.000000e+00> : vector<34x32xf32>
    %115 = tpu.matmul %114, %113, %cst_30 {dimension_numbers = #tpu.dot_dimension_numbers<[1], [0], [0], [1], [0, 0, 1, 1], [], []>} : vector<34x34xbf16>, vector<34x32xbf16>, vector<34x32xf32> -> vector<34x32xf32>
    %116 = vector.broadcast %110 : vector<34x1xf32> to vector<34x32xf32>
    %117 = arith.mulf %115, %116 : vector<34x32xf32>
    %118 = arith.addf %90, %117 : vector<34x32xf32>
    %c16_i32_31 = arith.constant 16 : i32
    %119 = vector.broadcast %c16_i32_31 : i32 to vector<1x32xi32>
    %120 = arith.cmpi sge, %63, %119 : vector<1x32xi32>
    %c24_i32 = arith.constant 24 : i32
    %121 = vector.broadcast %c24_i32 : i32 to vector<1x32xi32>
    %122 = arith.cmpi slt, %63, %121 : vector<1x32xi32>
    %123 = arith.andi %120, %122 : vector<1x32xi1>
    %124 = arith.extui %123 : vector<1x32xi1> to vector<1x32xi32>
    %125 = arith.sitofp %124 : vector<1x32xi32> to vector<1x32xf32>
    %126 = vector.broadcast %125 : vector<1x32xf32> to vector<34x32xf32>
    %127 = arith.mulf %31, %126 : vector<34x32xf32>
    %128 = arith.truncf %127 : vector<34x32xf32> to vector<34x32xbf16>
    %cst_32 = arith.constant dense<0.000000e+00> : vector<34x34xf32>
    %129 = tpu.matmul %128, %34, %cst_32 {dimension_numbers = #tpu.dot_dimension_numbers<[1], [1], [0], [0], [0, 0, 1, 0], [], []>} : vector<34x32xbf16>, vector<34x32xbf16>, vector<34x34xf32> -> vector<34x34xf32>
    %130 = arith.addf %129, %62 : vector<34x34xf32>
    %cst_33 = arith.constant dense<0xFF800000> : vector<34xf32>
    %131 = vector.multi_reduction <maximumf>, %130, %cst_33 [1] : vector<34x34xf32> to vector<34xf32>
    %132 = vector.shape_cast %131 : vector<34xf32> to vector<34x1xf32>
    %133 = vector.broadcast %132 : vector<34x1xf32> to vector<34x34xf32>
    %134 = arith.subf %130, %133 : vector<34x34xf32>
    %135 = math.exp %134 : vector<34x34xf32>
    %cst_34 = arith.constant dense<0.000000e+00> : vector<34xf32>
    %136 = vector.multi_reduction <add>, %135, %cst_34 [1] : vector<34x34xf32> to vector<34xf32>
    %137 = vector.shape_cast %136 : vector<34xf32> to vector<34x1xf32>
    %138 = tpu.reciprocal %137 {approx = true} : vector<34x1xf32> -> vector<34x1xf32>
    %139 = vector.broadcast %125 : vector<1x32xf32> to vector<34x32xf32>
    %140 = arith.mulf %33, %139 : vector<34x32xf32>
    %141 = arith.truncf %140 : vector<34x32xf32> to vector<34x32xbf16>
    %142 = arith.truncf %135 : vector<34x34xf32> to vector<34x34xbf16>
    %cst_35 = arith.constant dense<0.000000e+00> : vector<34x32xf32>
    %143 = tpu.matmul %142, %141, %cst_35 {dimension_numbers = #tpu.dot_dimension_numbers<[1], [0], [0], [1], [0, 0, 1, 1], [], []>} : vector<34x34xbf16>, vector<34x32xbf16>, vector<34x32xf32> -> vector<34x32xf32>
    %144 = vector.broadcast %138 : vector<34x1xf32> to vector<34x32xf32>
    %145 = arith.mulf %143, %144 : vector<34x32xf32>
    %146 = arith.addf %118, %145 : vector<34x32xf32>
    %c24_i32_36 = arith.constant 24 : i32
    %147 = vector.broadcast %c24_i32_36 : i32 to vector<1x32xi32>
    %148 = arith.cmpi sge, %63, %147 : vector<1x32xi32>
    %c32_i32 = arith.constant 32 : i32
    %149 = vector.broadcast %c32_i32 : i32 to vector<1x32xi32>
    %150 = arith.cmpi slt, %63, %149 : vector<1x32xi32>
    %151 = arith.andi %148, %150 : vector<1x32xi1>
    %152 = arith.extui %151 : vector<1x32xi1> to vector<1x32xi32>
    %153 = arith.sitofp %152 : vector<1x32xi32> to vector<1x32xf32>
    %154 = vector.broadcast %153 : vector<1x32xf32> to vector<34x32xf32>
    %155 = arith.mulf %31, %154 : vector<34x32xf32>
    %156 = arith.truncf %155 : vector<34x32xf32> to vector<34x32xbf16>
    %cst_37 = arith.constant dense<0.000000e+00> : vector<34x34xf32>
    %157 = tpu.matmul %156, %34, %cst_37 {dimension_numbers = #tpu.dot_dimension_numbers<[1], [1], [0], [0], [0, 0, 1, 0], [], []>} : vector<34x32xbf16>, vector<34x32xbf16>, vector<34x34xf32> -> vector<34x34xf32>
    %158 = arith.addf %157, %62 : vector<34x34xf32>
    %cst_38 = arith.constant dense<0xFF800000> : vector<34xf32>
    %159 = vector.multi_reduction <maximumf>, %158, %cst_38 [1] : vector<34x34xf32> to vector<34xf32>
    %160 = vector.shape_cast %159 : vector<34xf32> to vector<34x1xf32>
    %161 = vector.broadcast %160 : vector<34x1xf32> to vector<34x34xf32>
    %162 = arith.subf %158, %161 : vector<34x34xf32>
    %163 = math.exp %162 : vector<34x34xf32>
    %cst_39 = arith.constant dense<0.000000e+00> : vector<34xf32>
    %164 = vector.multi_reduction <add>, %163, %cst_39 [1] : vector<34x34xf32> to vector<34xf32>
    %165 = vector.shape_cast %164 : vector<34xf32> to vector<34x1xf32>
    %166 = tpu.reciprocal %165 {approx = true} : vector<34x1xf32> -> vector<34x1xf32>
    %167 = vector.broadcast %153 : vector<1x32xf32> to vector<34x32xf32>
    %168 = arith.mulf %33, %167 : vector<34x32xf32>
    %169 = arith.truncf %168 : vector<34x32xf32> to vector<34x32xbf16>
    %170 = arith.truncf %163 : vector<34x34xf32> to vector<34x34xbf16>
    %cst_40 = arith.constant dense<0.000000e+00> : vector<34x32xf32>
    %171 = tpu.matmul %170, %169, %cst_40 {dimension_numbers = #tpu.dot_dimension_numbers<[1], [0], [0], [1], [0, 0, 1, 1], [], []>} : vector<34x34xbf16>, vector<34x32xbf16>, vector<34x32xf32> -> vector<34x32xf32>
    %172 = vector.broadcast %166 : vector<34x1xf32> to vector<34x32xf32>
    %173 = arith.mulf %171, %172 : vector<34x32xf32>
    %174 = arith.addf %146, %173 : vector<34x32xf32>
    %175 = arith.truncf %174 : vector<34x32xf32> to vector<34x32xbf16>
    %c0_41 = arith.constant 0 : index
    %c0_42 = arith.constant 0 : index
    %176 = vector.load %arg3[%c0_41, %c0_42] : memref<32x32xbf16, #tpu.memory_space<vmem>>, vector<32x32xbf16>
    %cst_43 = arith.constant dense<0.000000e+00> : vector<34x32xf32>
    %177 = tpu.matmul %175, %176, %cst_43 {dimension_numbers = #tpu.dot_dimension_numbers<[1], [1], [0], [0], [0, 0, 1, 0], [], []>} : vector<34x32xbf16>, vector<32x32xbf16>, vector<34x32xf32> -> vector<34x32xf32>
    %178 = arith.truncf %177 : vector<34x32xf32> to vector<34x32xbf16>
    %c0_44 = arith.constant 0 : index
    %c0_45 = arith.constant 0 : index
    %179 = vector.load %arg4[%c0_44, %c0_45] : memref<8x32xbf16, #tpu.memory_space<vmem>>, vector<8x32xbf16>
    %cst_46 = arith.constant dense<0.000000e+00> : vector<34x8xf32>
    %180 = tpu.matmul %178, %179, %cst_46 {dimension_numbers = #tpu.dot_dimension_numbers<[1], [1], [0], [0], [0, 0, 1, 0], [], []>} : vector<34x32xbf16>, vector<8x32xbf16>, vector<34x8xf32> -> vector<34x8xf32>
    %181 = vector.broadcast %3 : vector<1x8xf32> to vector<34x8xf32>
    %182 = arith.addf %180, %181 : vector<34x8xf32>
    %cst_47 = arith.constant 0.000000e+00 : f32
    %183 = vector.broadcast %cst_47 : f32 to vector<34x8xf32>
    %184 = arith.maximumf %182, %183 : vector<34x8xf32>
    %185 = arith.truncf %184 : vector<34x8xf32> to vector<34x8xbf16>
    %c0_48 = arith.constant 0 : index
    %c0_49 = arith.constant 0 : index
    %186 = vector.load %arg5[%c0_48, %c0_49] : memref<32x8xbf16, #tpu.memory_space<vmem>>, vector<32x8xbf16>
    %cst_50 = arith.constant dense<0.000000e+00> : vector<34x32xf32>
    %187 = tpu.matmul %185, %186, %cst_50 {dimension_numbers = #tpu.dot_dimension_numbers<[1], [1], [0], [0], [0, 0, 1, 0], [], []>} : vector<34x8xbf16>, vector<32x8xbf16>, vector<34x32xf32> -> vector<34x32xf32>
    %188 = vector.broadcast %4 : vector<1x32xf32> to vector<34x32xf32>
    %189 = arith.addf %187, %188 : vector<34x32xf32>
    %190 = arith.addf %177, %189 : vector<34x32xf32>
    %c0_51 = arith.constant 0 : index
    %c0_52 = arith.constant 0 : index
    %191 = vector.load %arg6[%c0_51, %c0_52] : memref<34x32xf32, #tpu.memory_space<vmem>>, vector<34x32xf32>
    tpu.vector_store %arg6[%c0_51, %c0_52], %190 {strides = array<i32>} : memref<34x32xf32, #tpu.memory_space<vmem>>, vector<34x32xf32>,
    return
  }
}

</mosaic_0001>

<llo_original>
// kernel: tpu_custom_call.1
$region0: #{tpu_custom_call.1}
  #allocation0 [shape = 'u32[]', space=smem, size = 0x4, offset = 0x4, fixed_abs, tag = 'smem constant byte address 0x4 - core index']
  #allocation1 [shape = 'u32[144,128]{1,0:T(1,128)}', space=vmem, size = 0x12000, scoped, tag = 'internal scratch']
  %s0 = inlined_call_operand.vmem [shape: f32[34,32], index: 0, kind: input, shape index: {}]
  %s1 = inlined_call_operand.vmem [shape: f32[5,96], index: 1, kind: input, shape index: {}]
  %s2 = inlined_call_operand.vmem [shape: bf16[96,32], index: 2, kind: input, shape index: {}]
  %s3 = inlined_call_operand.vmem [shape: bf16[32,32], index: 3, kind: input, shape index: {}]
  %s4 = inlined_call_operand.vmem [shape: bf16[8,32], index: 4, kind: input, shape index: {}]
  %s5 = inlined_call_operand.vmem [shape: bf16[32,8], index: 5, kind: input, shape index: {}]
  %s6 = inlined_call_operand.vmem [shape: f32[34,32], index: 6, kind: output, shape index: {}]
  %s7 = sld [smem:[#allocation0]]
  $region34: #{tpu_custom_call.1} parent=0
    _
  %s9 = ssub.s32 1, %s7
  %s10 = scalar_select 0, %s9, %s7
  // Predicated region
  $region2: #{tpu_custom_call.1} parent=0 // pred_check
    _
  $region3: #{tpu_custom_call.1} parent=0 // pred_check_branch
    %12 = sbr.rel (0) target = $region5
  $region4: #{tpu_custom_call.1} parent=0 // pred_region
    _
  $region5: #{tpu_custom_call.1} parent=0 // pred_fallthru
    _
  // Predicated region
  $region6: #{tpu_custom_call.1} parent=0 // pred_check
    _
  $region7: #{tpu_custom_call.1} parent=0 // pred_check_branch
    %14 = sbr.rel (0) target = $region9
  $region8: #{tpu_custom_call.1} parent=0 // pred_region
    _
  $region9: #{tpu_custom_call.1} parent=0 // pred_fallthru
    _
  // Predicated region
  $region10: #{tpu_custom_call.1} parent=0 // pred_check
    _
  $region11: #{tpu_custom_call.1} parent=0 // pred_check_branch
    %16 = sbr.rel (0) target = $region13
  $region12: #{tpu_custom_call.1} parent=0 // pred_region
    _
  $region13: #{tpu_custom_call.1} parent=0 // pred_fallthru
    _
  // Predicated region
  $region14: #{tpu_custom_call.1} parent=0 // pred_check
    _
  $region15: #{tpu_custom_call.1} parent=0 // pred_check_branch
    %18 = sbr.rel (0) target = $region17
  $region16: #{tpu_custom_call.1} parent=0 // pred_region
    _
  $region17: #{tpu_custom_call.1} parent=0 // pred_fallthru
    _
  // Predicated region
  $region18: #{tpu_custom_call.1} parent=0 // pred_check
    _
  $region19: #{tpu_custom_call.1} parent=0 // pred_check_branch
    %20 = sbr.rel (0) target = $region21
  $region20: #{tpu_custom_call.1} parent=0 // pred_region
    _
  $region21: #{tpu_custom_call.1} parent=0 // pred_fallthru
    _
  // Predicated region
  $region22: #{tpu_custom_call.1} parent=0 // pred_check
    _
  $region23: #{tpu_custom_call.1} parent=0 // pred_check_branch
    %22 = sbr.rel (0) target = $region25
  $region24: #{tpu_custom_call.1} parent=0 // pred_region
    _
  $region25: #{tpu_custom_call.1} parent=0 // pred_fallthru
    _
  %v24 = vld [vmem:[%s1] sm:$0x1]
  %v25 = vld [vmem:[%s1 + $0x1] sm:$0x1]
  %v26 = vld [vmem:[%s1 + $0x2] sm:$0x1]
  %v27 = vld [vmem:[%s1 + $0x3] sm:$0x1]
  %v28 = vld [vmem:[%s1 + $0x4] sm:$0x1]
  %v29 = vld [vmem:[%s0] sm:$0xff]
  %v30 = vld [vmem:[%s0 + $0x8] sm:$0xff]
  %v31 = vld [vmem:[%s0 + $0x10] sm:$0xff]
  %v32 = vld [vmem:[%s0 + $0x18] sm:$0xff]
  %v33 = vld [vmem:[%s0 + $0x20] sm:$0x3]
  %vm34 = vcmask 261120
  %v35 = vsel %vm34, %v29, 0.0
  %36 = vadd.xlane.f32.xlu0 %v35
  %v37 = vpop.xlane.xlu0 %36
  %v38 = vsel %vm34, %v30, 0.0
  %39 = vadd.xlane.f32.xlu0 %v38
  %v40 = vpop.xlane.xlu0 %39
  %v41 = vsel %vm34, %v31, 0.0
  %42 = vadd.xlane.f32.xlu0 %v41
  %v43 = vpop.xlane.xlu0 %42
  %v44 = vsel %vm34, %v32, 0.0
  %45 = vadd.xlane.f32.xlu0 %v44
  %v46 = vpop.xlane.xlu0 %45
  %vm47 = vcmask 254976
  %v48 = vsel %vm47, %v33, 0.0
  %49 = vadd.xlane.f32.xlu0 %v48
  %v50 = vpop.xlane.xlu0 %49
  %v51 = vrcp.pop 32.0
  %v52 = vmul.f32 %v37, %v51
  %v53 = vmul.f32 %v40, %v51
  %v54 = vmul.f32 %v43, %v51
  %v55 = vmul.f32 %v46, %v51
  %v56 = vmul.f32 %v50, %v51
  %v57 = vsub.f32 %v29, %v52
  %v58 = vsub.f32 %v30, %v53
  %v59 = vsub.f32 %v31, %v54
  %v60 = vsub.f32 %v32, %v55
  %v61 = vsub.f32 %v33, %v56
  %v62 = vmul.f32 %v57, %v57
  %v63 = vmul.f32 %v58, %v58
  %v64 = vmul.f32 %v59, %v59
  %v65 = vmul.f32 %v60, %v60
  %v66 = vmul.f32 %v61, %v61
  %v67 = vsel %vm34, %v62, 0.0
  %68 = vadd.xlane.f32.xlu0 %v67
  %v69 = vpop.xlane.xlu0 %68
  %v70 = vsel %vm34, %v63, 0.0
  %71 = vadd.xlane.f32.xlu0 %v70
  %v72 = vpop.xlane.xlu0 %71
  %v73 = vsel %vm34, %v64, 0.0
  %74 = vadd.xlane.f32.xlu0 %v73
  %v75 = vpop.xlane.xlu0 %74
  %v76 = vsel %vm34, %v65, 0.0
  %77 = vadd.xlane.f32.xlu0 %v76
  %v78 = vpop.xlane.xlu0 %77
  %v79 = vsel %vm47, %v66, 0.0
  %80 = vadd.xlane.f32.xlu0 %v79
  %v81 = vpop.xlane.xlu0 %80
  %v82 = vmul.f32 %v69, %v51
  %v83 = vmul.f32 %v72, %v51
  %v84 = vmul.f32 %v75, %v51
  %v85 = vmul.f32 %v78, %v51
  %v86 = vmul.f32 %v81, %v51
  %v87 = vadd.f32 %v82, 1e-06
  %v88 = vadd.f32 %v83, 1e-06
  %v89 = vadd.f32 %v84, 1e-06
  %v90 = vadd.f32 %v85, 1e-06
  %v91 = vadd.f32 %v86, 1e-06
  %v92 = vrsqrt.pop %v87
  %v93 = vrsqrt.pop %v88
  %v94 = vrsqrt.pop %v89
  %v95 = vrsqrt.pop %v90
  %v96 = vrsqrt.pop %v91
  %v97 = vmul.f32 %v57, %v92
  %v98 = vmul.f32 %v58, %v93
  %v99 = vmul.f32 %v59, %v94
  %v100 = vmul.f32 %v60, %v95
  %v101 = vmul.f32 %v61, %v96
  %v102 = vlaneseq
  %v103 = vshrl.u32 %v102, 7
  %v104 = vsub.s32 0, %v103
  %v105 = vrot.slane %v24, %v104
  %v106 = vmul.f32 %v97, %v105
  %v107 = vmul.f32 %v98, %v105
  %v108 = vmul.f32 %v99, %v105
  %v109 = vmul.f32 %v100, %v105
  %v110 = vmul.f32 %v101, %v105
  %v111 = vlaneseq
  %v112 = vshrl.u32 %v111, 7
  %v113 = vsub.s32 0, %v112
  %v114 = vrot.slane %v25, %v113
  %v115 = vadd.f32 %v106, %v114
  %v116 = vadd.f32 %v107, %v114
  %v117 = vadd.f32 %v108, %v114
  %v118 = vadd.f32 %v109, %v114
  %v119 = vadd.f32 %v110, %v114
  %v120 = vpack.c.bf16 %v116, %v115
  %v121 = vpack.c.bf16 %v118, %v117
  %v122 = vpack.c.bf16 %v119, %v119
  %v123 = vld [vmem:[%s2] sm:$0xf]
  %v124 = vld [vmem:[%s2 + $0x4] sm:$0xf]
  %v125 = vld [vmem:[%s2 + $0x8] sm:$0xf]
  %v126 = vld [vmem:[%s2 + $0xc] sm:$0xf]
  %v127 = vld [vmem:[%s2 + $0x10] sm:$0xf]
  %v128 = vld [vmem:[%s2 + $0x14] sm:$0xf]
  %v129 = vld [vmem:[%s2 + $0x18] sm:$0xf]
  %v130 = vld [vmem:[%s2 + $0x1c] sm:$0xf]
  %v131 = vld [vmem:[%s2 + $0x20] sm:$0xf]
  %v132 = vld [vmem:[%s2 + $0x24] sm:$0xf]
  %v133 = vld [vmem:[%s2 + $0x28] sm:$0xf]
  %v134 = vld [vmem:[%s2 + $0x2c] sm:$0xf]
  %v135 = vlaneseq
  %v136 = vshrl.u32 %v135, 7
  %v137 = vsub.s32 0, %v136
  %v138 = vrot.slane %v26, %v137
  %v151 = vunpack.c.l.b16 %v123
  %v152 = vunpack.c.l.b16 %v124
  %v153 = vunpack.c.l.b16 %v125
  %v154 = vunpack.c.l.b16 %v126
  %v155 = vunpack.c.l.b16 %v127
  %v156 = vunpack.c.l.b16 %v128
  %v157 = vunpack.c.l.b16 %v129
  %v158 = vunpack.c.l.b16 %v130
  %v159 = vunpack.c.l.b16 %v131
  %v160 = vunpack.c.l.b16 %v132
  %v161 = vunpack.c.l.b16 %v133
  %v162 = vunpack.c.l.b16 %v134
  %v163 = vpack.c.b16 %v152, %v151
  %v164 = vpack.c.b16 %v154, %v153
  %v165 = vpack.c.b16 %v156, %v155
  %v166 = vpack.c.b16 %v158, %v157
  %v167 = vpack.c.b16 %v160, %v159
  %v168 = vpack.c.b16 %v162, %v161
  %v170 = vsel %vm34, %v120, 0
  %v173 = vsel %vm34, %v121, 0
  %v176 = vsel %vm34, %v122, 0
  %v179 = vsel %vm34, %v163, 0
  %v182 = vsel %vm34, %v164, 0
  %v185 = vsel %vm34, %v165, 0
  %v188 = vsel %vm34, %v166, 0
  %v191 = vsel %vm34, %v167, 0
  %v194 = vsel %vm34, %v168, 0
  %196 = vmatprep.subr.bf16.mxu0 0
  %197 = vmatpush1.bf16.xpose.msra.mxu0 %v179
  %198 = vmatprep.subr.bf16.mxu0 0
  %199 = vmatpush1.bf16.xpose.msra.mxu0 %v182
  %200 = vmatprep.subr.bf16.mxu0 0
  %201 = vmatpush1.bf16.xpose.msra.mxu0 %v185
  %202 = vmatprep.subr.bf16.mxu0 0
  %203 = vmatpush1.bf16.xpose.msra.mxu0 %v188
  %204 = vmatprep.subr.bf16.mxu0 0
  %205 = vmatpush1.bf16.xpose.msra.mxu0 %v191
  %206 = vmatprep.subr.bf16.mxu0 0
  %207 = vmatpush1.bf16.xpose.msra.mxu0 %v194
  %208 = vmatprep.subr.bf16.mxu0 0
  %209 = vmatpush1.bf16.xpose.msra.mxu0 0
  %210 = vmatprep.subr.bf16.mxu0 0
  %211 = vmatpush1.bf16.xpose.msra.mxu0 0
  %212 = vmatprep.subr.bf16.mxu0 0
  %213 = vmatpush1.bf16.xpose.msra.mxu0 0
  %214 = vmatprep.subr.bf16.mxu0 0
  %215 = vmatpush1.bf16.xpose.msra.mxu0 0
  %216 = vmatprep.subr.bf16.mxu0 0
  %217 = vmatpush1.bf16.xpose.msra.mxu0 0
  %218 = vmatprep.subr.bf16.mxu0 0
  %219 = vmatpush1.bf16.xpose.msra.mxu0 0
  %220 = vmatprep.subr.bf16.mxu0 0
  %221 = vmatpush1.bf16.xpose.msra.mxu0 0
  %222 = vmatprep.subr.bf16.mxu0 0
  %223 = vmatpush1.bf16.xpose.msra.mxu0 0
  %224 = vmatprep.subr.bf16.mxu0 0
  %225 = vmatpush1.bf16.xpose.msra.mxu0 0
  %226 = vmatprep.subr.bf16.mxu0 0
  %227 = vmatpush1.bf16.xpose.msra.mxu0 0
  %228 = vmatprep.mubr.bf16.mxu0 0
  %229 = vmatmul.mubr.bf16.gmra.mrb[0].mxu0 %v170
  %v230 = vpop.f32.mrb[0].mxu0
  %v231 = vadd.f32 %v138, %v230
  %v232 = vpop.f32.mrb[0].mxu0
  %v233 = vpop.f32.mrb[0].mxu0
  %v234 = vadd.f32 %v138, %v233
  %v235 = vpop.f32.mrb[0].mxu0
  %236 = vmatprep.mubr.bf16.mxu0 0
  %237 = vmatmul.mubr.bf16.gmra.mrb[0].mxu0 %v173
  %v238 = vpop.f32.mrb[0].mxu0
  %v239 = vadd.f32 %v138, %v238
  %v240 = vpop.f32.mrb[0].mxu0
  %v241 = vpop.f32.mrb[0].mxu0
  %v242 = vadd.f32 %v138, %v241
  %v243 = vpop.f32.mrb[0].mxu0
  %244 = vmatprep.mubr.bf16.mxu0 0
  %245 = vmatmul.mubr.bf16.gmra.mrb[0].mxu0 %v176
  %v246 = vpop.f32.mrb[0].mxu0
  %v247 = vadd.f32 %v138, %v246
  %v248 = vpop.f32.mrb[0].mxu0
  %v249 = vpop.f32.mrb[0].mxu0
  %v250 = vpop.f32.mrb[0].mxu0
  %251 = vdwg.mxu0
  %v252 = vpack.c.bf16 %v234, %v231
  %v253 = vpack.c.bf16 %v242, %v239
  %v254 = vpack.c.bf16 %v247, %v247
  %v255 = vlaneseq
  %v256 = vshrl.u32 %v255, 7
  %v257 = vadd.s32 %v256, 8
  %v258 = vadd.s32 %v256, 16
  %v259 = vadd.s32 %v256, 24
  %v260 = vadd.s32 %v256, 32
  %v261 = vlaneseq
  %v262 = vand.u32 %v261, 127
  %vm263 = vcmp.ge.s32.totalorder %v256, 0
  %vm264 = vcmp.ge.s32.totalorder %v257, 0
  %vm265 = vcmp.ge.s32.totalorder %v258, 0
  %vm266 = vcmp.ge.s32.totalorder %v259, 0
  %vm267 = vcmp.ge.s32.totalorder %v260, 0
  %vm268 = vcmp.lt.s32.totalorder %v256, 17
  %vm269 = vcmp.lt.s32.totalorder %v257, 17
  %vm270 = vcmp.lt.s32.totalorder %v258, 17
  %vm271 = vcmp.lt.s32.totalorder %v259, 17
  %vm272 = vcmp.lt.s32.totalorder %v260, 17
  %vm273 = vmand %vm263, %vm268
  %vm274 = vmand %vm264, %vm269
  %vm275 = vmand %vm265, %vm270
  %vm276 = vmand %vm266, %vm271
  %vm277 = vmand %vm267, %vm272
  %vm278 = vcmp.ge.s32.totalorder %v262, 0
  %vm279 = vcmp.lt.s32.totalorder %v262, 17
  %vm280 = vmand %vm278, %vm279
  %vm281 = vmand %vm273, %vm280
  %vm282 = vmand %vm274, %vm280
  %vm283 = vmand %vm275, %vm280
  %vm284 = vmand %vm276, %vm280
  %vm285 = vmand %vm277, %vm280
  %vm286 = vcmp.ge.s32.totalorder %v256, 17
  %vm287 = vcmp.ge.s32.totalorder %v257, 17
  %vm288 = vcmp.ge.s32.totalorder %v258, 17
  %vm289 = vcmp.ge.s32.totalorder %v259, 17
  %vm290 = vcmp.ge.s32.totalorder %v260, 17
  %vm291 = vcmp.lt.s32.totalorder %v256, 34
  %vm292 = vcmp.lt.s32.totalorder %v257, 34
  %vm293 = vcmp.lt.s32.totalorder %v258, 34
  %vm294 = vcmp.lt.s32.totalorder %v259, 34
  %vm295 = vcmp.lt.s32.totalorder %v260, 34
  %vm296 = vmand %vm286, %vm291
  %vm297 = vmand %vm287, %vm292
  %vm298 = vmand %vm288, %vm293
  %vm299 = vmand %vm289, %vm294
  %vm300 = vmand %vm290, %vm295
  %vm301 = vcmp.ge.s32.totalorder %v262, 17
  %vm302 = vcmp.lt.s32.totalorder %v262, 34
  %vm303 = vmand %vm301, %vm302
  %vm304 = vmand %vm296, %vm303
  %vm305 = vmand %vm297, %vm303
  %vm306 = vmand %vm298, %vm303
  %vm307 = vmand %vm299, %vm303
  %vm308 = vmand %vm300, %vm303
  %vm309 = vmor %vm281, %vm304
  %vm310 = vmor %vm282, %vm305
  %vm311 = vmor %vm283, %vm306
  %vm312 = vmor %vm284, %vm307
  %vm313 = vmor %vm285, %vm308
  %v314 = vsel %vm309, 0.0, -1e+30
  %v315 = vsel %vm310, 0.0, -1e+30
  %v316 = vsel %vm311, 0.0, -1e+30
  %v317 = vsel %vm312, 0.0, -1e+30
  %v318 = vsel %vm313, 0.0, -1e+30
  %vm319 = vcmp.lt.s32.totalorder %v262, 8
  %vm320 = vmand %vm278, %vm319
  %v321 = vsel %vm320, 1, 0
  %v322 = vcvt.s32.f32 %v321
  %v323 = vmul.f32 %v231, %v322
  %v324 = vmul.f32 %v234, %v322
  %v325 = vmul.f32 %v239, %v322
  %v326 = vmul.f32 %v242, %v322
  %v327 = vmul.f32 %v247, %v322
  %v328 = vpack.c.bf16 %v324, %v323
  %v329 = vpack.c.bf16 %v326, %v325
  %v330 = vpack.c.bf16 %v327, %v327
  %334 = vrot.lane.b32.xlu0 %v252, 96
  %v335 = vpop.permute.xlu0 %334
  %336 = vrot.lane.b32.xlu0 %v253, 96
  %v337 = vpop.permute.xlu0 %336
  %338 = vrot.lane.b32.xlu0 %v254, 96
  %v339 = vpop.permute.xlu0 %338
  %v341 = vsel %vm34, %v328, 0
  %v344 = vsel %vm34, %v329, 0
  %v347 = vsel %vm34, %v330, 0
  %v350 = vsel %vm34, %v335, 0
  %v353 = vsel %vm34, %v337, 0
  %v356 = vsel %vm34, %v339, 0
  %358 = vmatprep.subr.bf16.mxu0 0
  %359 = vmatpush1.bf16.xpose.msra.mxu0 %v350
  %360 = vmatprep.subr.bf16.mxu0 0
  %361 = vmatpush1.bf16.xpose.msra.mxu0 %v353
  %362 = vmatprep.subr.bf16.mxu0 0
  %363 = vmatpush1.bf16.xpose.msra.mxu0 %v356
  %364 = vmatprep.subr.bf16.mxu0 0
  %365 = vmatpush1.bf16.xpose.msra.mxu0 0
  %366 = vmatprep.subr.bf16.mxu0 0
  %367 = vmatpush1.bf16.xpose.msra.mxu0 0
  %368 = vmatprep.subr.bf16.mxu0 0
  %369 = vmatpush1.bf16.xpose.msra.mxu0 0
  %370 = vmatprep.subr.bf16.mxu0 0
  %371 = vmatpush1.bf16.xpose.msra.mxu0 0
  %372 = vmatprep.subr.bf16.mxu0 0
  %373 = vmatpush1.bf16.xpose.msra.mxu0 0
  %374 = vmatprep.subr.bf16.mxu0 0
  %375 = vmatpush1.bf16.xpose.msra.mxu0 0
  %376 = vmatprep.subr.bf16.mxu0 0
  %377 = vmatpush1.bf16.xpose.msra.mxu0 0
  %378 = vmatprep.subr.bf16.mxu0 0
  %379 = vmatpush1.bf16.xpose.msra.mxu0 0
  %380 = vmatprep.subr.bf16.mxu0 0
  %381 = vmatpush1.bf16.xpose.msra.mxu0 0
  %382 = vmatprep.subr.bf16.mxu0 0
  %383 = vmatpush1.bf16.xpose.msra.mxu0 0
  %384 = vmatprep.subr.bf16.mxu0 0
  %385 = vmatpush1.bf16.xpose.msra.mxu0 0
  %386 = vmatprep.subr.bf16.mxu0 0
  %387 = vmatpush1.bf16.xpose.msra.mxu0 0
  %388 = vmatprep.subr.bf16.mxu0 0
  %389 = vmatpush1.bf16.xpose.msra.mxu0 0
  %390 = vmatprep.mubr.bf16.mxu0 0
  %391 = vmatmul.mubr.bf16.gmra.mrb[0].mxu0 %v341
  %v392 = vpop.f32.mrb[0].mxu0
  %v393 = vadd.f32 %v314, %v392
  %v394 = vpop.f32.mrb[0].mxu0
  %v395 = vpop.f32.mrb[0].mxu0
  %v396 = vadd.f32 %v315, %v395
  %v397 = vpop.f32.mrb[0].mxu0
  %398 = vmatprep.mubr.bf16.mxu0 0
  %399 = vmatmul.mubr.bf16.gmra.mrb[0].mxu0 %v344
  %v400 = vpop.f32.mrb[0].mxu0
  %v401 = vadd.f32 %v316, %v400
  %v402 = vpop.f32.mrb[0].mxu0
  %v403 = vpop.f32.mrb[0].mxu0
  %v404 = vadd.f32 %v317, %v403
  %v405 = vpop.f32.mrb[0].mxu0
  %406 = vmatprep.mubr.bf16.mxu0 0
  %407 = vmatmul.mubr.bf16.gmra.mrb[0].mxu0 %v347
  %v408 = vpop.f32.mrb[0].mxu0
  %v409 = vadd.f32 %v318, %v408
  %v410 = vpop.f32.mrb[0].mxu0
  %v411 = vpop.f32.mrb[0].mxu0
  %v412 = vpop.f32.mrb[0].mxu0
  %413 = vdwg.mxu0
  %vm414 = vcmask 277504
  %v415 = vsel %vm414, %v393, -inf
  %416 = vmax.xlane.f32.xlu0 %v415
  %v417 = vpop.xlane.xlu0 %416
  %v418 = vsel %vm414, %v396, -inf
  %419 = vmax.xlane.f32.xlu0 %v418
  %v420 = vpop.xlane.xlu0 %419
  %v421 = vsel %vm414, %v401, -inf
  %422 = vmax.xlane.f32.xlu0 %v421
  %v423 = vpop.xlane.xlu0 %422
  %v424 = vsel %vm414, %v404, -inf
  %425 = vmax.xlane.f32.xlu0 %v424
  %v426 = vpop.xlane.xlu0 %425
  %vm427 = vcmask 271360
  %v428 = vsel %vm427, %v409, -inf
  %429 = vmax.xlane.f32.xlu0 %v428
  %v430 = vpop.xlane.xlu0 %429
  %v431 = vsub.f32 %v393, %v417
  %v432 = vsub.f32 %v396, %v420
  %v433 = vsub.f32 %v401, %v423
  %v434 = vsub.f32 %v404, %v426
  %v435 = vsub.f32 %v409, %v430
  %v436 = vmul.f32 %v431, 1.442695
  %v437 = vpow.pop %v436
  %v438 = vmul.f32 %v432, 1.442695
  %v439 = vpow.pop %v438
  %v440 = vmul.f32 %v433, 1.442695
  %v441 = vpow.pop %v440
  %v442 = vmul.f32 %v434, 1.442695
  %v443 = vpow.pop %v442
  %v444 = vmul.f32 %v435, 1.442695
  %v445 = vpow.pop %v444
  %v446 = vsel %vm414, %v437, 0.0
  %447 = vadd.xlane.f32.xlu0 %v446
  %v448 = vpop.xlane.xlu0 %447
  %v449 = vsel %vm414, %v439, 0.0
  %450 = vadd.xlane.f32.xlu0 %v449
  %v451 = vpop.xlane.xlu0 %450
  %v452 = vsel %vm414, %v441, 0.0
  %453 = vadd.xlane.f32.xlu0 %v452
  %v454 = vpop.xlane.xlu0 %453
  %v455 = vsel %vm414, %v443, 0.0
  %456 = vadd.xlane.f32.xlu0 %v455
  %v457 = vpop.xlane.xlu0 %456
  %v458 = vsel %vm427, %v445, 0.0
  %459 = vadd.xlane.f32.xlu0 %v458
  %v460 = vpop.xlane.xlu0 %459
  %v461 = vrcp.pop %v448
  %v462 = vrcp.pop %v451
  %v463 = vrcp.pop %v454
  %v464 = vrcp.pop %v457
  %v465 = vrcp.pop %v460
  %467 = vrot.lane.b32.xlu0 %v322, 64
  %v468 = vpop.permute.xlu0 %467
  %v470 = vmul.f32 %v231, %v468
  %v471 = vmul.f32 %v234, %v468
  %v472 = vmul.f32 %v239, %v468
  %v473 = vmul.f32 %v242, %v468
  %v474 = vmul.f32 %v247, %v468
  %v475 = vpack.c.bf16 %v471, %v470
  %v476 = vpack.c.bf16 %v473, %v472
  %v477 = vpack.c.bf16 %v474, %v474
  %v478 = vpack.c.bf16 %v439, %v437
  %v479 = vpack.c.bf16 %v443, %v441
  %v480 = vpack.c.bf16 %v445, %v445
  %484 = vrot.lane.b32.xlu0 %v475, 64
  %v485 = vpop.permute.xlu0 %484
  %486 = vrot.lane.b32.xlu0 %v476, 64
  %v487 = vpop.permute.xlu0 %486
  %488 = vrot.lane.b32.xlu0 %v477, 64
  %v489 = vpop.permute.xlu0 %488
  %v493 = vsel %vm414, %v478, 0
  %v496 = vsel %vm414, %v479, 0
  %v499 = vsel %vm414, %v480, 0
  %vm501 = vcmask 1040384
  %v503 = vsel %vm501, %v489, 0
  %505 = vmatprep.subr.bf16.mxu0 0
  %506 = vmatpush1.bf16.msra.mxu0 %v485
  %507 = vmatprep.subr.bf16.mxu0 0
  %508 = vmatpush1.bf16.msra.mxu0 %v487
  %509 = vmatprep.subr.bf16.mxu0 0
  %510 = vmatpush1.bf16.msra.mxu0 %v503
  %511 = vmatprep.subr.bf16.mxu0 0
  %512 = vmatpush1.bf16.msra.mxu0 0
  %513 = vmatprep.subr.bf16.mxu0 0
  %514 = vmatpush1.bf16.msra.mxu0 0
  %515 = vmatprep.subr.bf16.mxu0 0
  %516 = vmatpush1.bf16.msra.mxu0 0
  %517 = vmatprep.subr.bf16.mxu0 0
  %518 = vmatpush1.bf16.msra.mxu0 0
  %519 = vmatprep.subr.bf16.mxu0 0
  %520 = vmatpush1.bf16.msra.mxu0 0
  %521 = vmatprep.subr.bf16.mxu0 0
  %522 = vmatpush1.bf16.msra.mxu0 0
  %523 = vmatprep.subr.bf16.mxu0 0
  %524 = vmatpush1.bf16.msra.mxu0 0
  %525 = vmatprep.subr.bf16.mxu0 0
  %526 = vmatpush1.bf16.msra.mxu0 0
  %527 = vmatprep.subr.bf16.mxu0 0
  %528 = vmatpush1.bf16.msra.mxu0 0
  %529 = vmatprep.subr.bf16.mxu0 0
  %530 = vmatpush1.bf16.msra.mxu0 0
  %531 = vmatprep.subr.bf16.mxu0 0
  %532 = vmatpush1.bf16.msra.mxu0 0
  %533 = vmatprep.subr.bf16.mxu0 0
  %534 = vmatpush1.bf16.msra.mxu0 0
  %535 = vmatprep.subr.bf16.mxu0 0
  %536 = vmatpush1.bf16.msra.mxu0 0
  %537 = vmatprep.mubr.bf16.mxu0 0
  %538 = vmatmul.mubr.bf16.gmra.mrb[0].mxu0 %v493
  %v539 = vpop.f32.mrb[0].mxu0
  %v540 = vadd.f32 0.0, %v539
  %v541 = vpop.f32.mrb[0].mxu0
  %v542 = vpop.f32.mrb[0].mxu0
  %v543 = vadd.f32 0.0, %v542
  %v544 = vpop.f32.mrb[0].mxu0
  %545 = vmatprep.mubr.bf16.mxu0 0
  %546 = vmatmul.mubr.bf16.gmra.mrb[0].mxu0 %v496
  %v547 = vpop.f32.mrb[0].mxu0
  %v548 = vadd.f32 0.0, %v547
  %v549 = vpop.f32.mrb[0].mxu0
  %v550 = vpop.f32.mrb[0].mxu0
  %v551 = vadd.f32 0.0, %v550
  %v552 = vpop.f32.mrb[0].mxu0
  %553 = vmatprep.mubr.bf16.mxu0 0
  %554 = vmatmul.mubr.bf16.gmra.mrb[0].mxu0 %v499
  %v555 = vpop.f32.mrb[0].mxu0
  %v556 = vadd.f32 0.0, %v555
  %v557 = vpop.f32.mrb[0].mxu0
  %v558 = vpop.f32.mrb[0].mxu0
  %v559 = vpop.f32.mrb[0].mxu0
  %560 = vdwg.mxu0
  %v561 = vmul.f32 %v540, %v461
  %v562 = vmul.f32 %v543, %v462
  %v563 = vmul.f32 %v548, %v463
  %v564 = vmul.f32 %v551, %v464
  %v565 = vmul.f32 %v556, %v465
  %vm566 = vcmp.ge.s32.totalorder %v262, 8
  %vm567 = vcmp.lt.s32.totalorder %v262, 16
  %vm568 = vmand %vm566, %vm567
  %v569 = vsel %vm568, 1, 0
  %v570 = vcvt.s32.f32 %v569
  %v571 = vmul.f32 %v231, %v570
  %v572 = vmul.f32 %v234, %v570
  %v573 = vmul.f32 %v239, %v570
  %v574 = vmul.f32 %v242, %v570
  %v575 = vmul.f32 %v247, %v570
  %v576 = vpack.c.bf16 %v572, %v571
  %v577 = vpack.c.bf16 %v574, %v573
  %v578 = vpack.c.bf16 %v575, %v575
  %v580 = vsel %vm34, %v576, 0
  %v583 = vsel %vm34, %v577, 0
  %v586 = vsel %vm34, %v578, 0
  %588 = vmatprep.subr.bf16.mxu0 0
  %589 = vmatpush1.bf16.xpose.msra.mxu0 %v350
  %590 = vmatprep.subr.bf16.mxu0 0
  %591 = vmatpush1.bf16.xpose.msra.mxu0 %v353
  %592 = vmatprep.subr.bf16.mxu0 0
  %593 = vmatpush1.bf16.xpose.msra.mxu0 %v356
  %594 = vmatprep.subr.bf16.mxu0 0
  %595 = vmatpush1.bf16.xpose.msra.mxu0 0
  %596 = vmatprep.subr.bf16.mxu0 0
  %597 = vmatpush1.bf16.xpose.msra.mxu0 0
  %598 = vmatprep.subr.bf16.mxu0 0
  %599 = vmatpush1.bf16.xpose.msra.mxu0 0
  %600 = vmatprep.subr.bf16.mxu0 0
  %601 = vmatpush1.bf16.xpose.msra.mxu0 0
  %602 = vmatprep.subr.bf16.mxu0 0
  %603 = vmatpush1.bf16.xpose.msra.mxu0 0
  %604 = vmatprep.subr.bf16.mxu0 0
  %605 = vmatpush1.bf16.xpose.msra.mxu0 0
  %606 = vmatprep.subr.bf16.mxu0 0
  %607 = vmatpush1.bf16.xpose.msra.mxu0 0
  %608 = vmatprep.subr.bf16.mxu0 0
  %609 = vmatpush1.bf16.xpose.msra.mxu0 0
  %610 = vmatprep.subr.bf16.mxu0 0
  %611 = vmatpush1.bf16.xpose.msra.mxu0 0
  %612 = vmatprep.subr.bf16.mxu0 0
  %613 = vmatpush1.bf16.xpose.msra.mxu0 0
  %614 = vmatprep.subr.bf16.mxu0 0
  %615 = vmatpush1.bf16.xpose.msra.mxu0 0
  %616 = vmatprep.subr.bf16.mxu0 0
  %617 = vmatpush1.bf16.xpose.msra.mxu0 0
  %618 = vmatprep.subr.bf16.mxu0 0
  %619 = vmatpush1.bf16.xpose.msra.mxu0 0
  %620 = vmatprep.mubr.bf16.mxu0 0
  %621 = vmatmul.mubr.bf16.gmra.mrb[0].mxu0 %v580
  %v622 = vpop.f32.mrb[0].mxu0
  %v623 = vadd.f32 %v314, %v622
  %v624 = vpop.f32.mrb[0].mxu0
  %v625 = vpop.f32.mrb[0].mxu0
  %v626 = vadd.f32 %v315, %v625
  %v627 = vpop.f32.mrb[0].mxu0
  %628 = vmatprep.mubr.bf16.mxu0 0
  %629 = vmatmul.mubr.bf16.gmra.mrb[0].mxu0 %v583
  %v630 = vpop.f32.mrb[0].mxu0
  %v631 = vadd.f32 %v316, %v630
  %v632 = vpop.f32.mrb[0].mxu0
  %v633 = vpop.f32.mrb[0].mxu0
  %v634 = vadd.f32 %v317, %v633
  %v635 = vpop.f32.mrb[0].mxu0
  %636 = vmatprep.mubr.bf16.mxu0 0
  %637 = vmatmul.mubr.bf16.gmra.mrb[0].mxu0 %v586
  %v638 = vpop.f32.mrb[0].mxu0
  %v639 = vadd.f32 %v318, %v638
  %v640 = vpop.f32.mrb[0].mxu0
  %v641 = vpop.f32.mrb[0].mxu0
  %v642 = vpop.f32.mrb[0].mxu0
  %643 = vdwg.mxu0
  %v644 = vsel %vm414, %v623, -inf
  %645 = vmax.xlane.f32.xlu0 %v644
  %v646 = vpop.xlane.xlu0 %645
  %v647 = vsel %vm414, %v626, -inf
  %648 = vmax.xlane.f32.xlu0 %v647
  %v649 = vpop.xlane.xlu0 %648
  %v650 = vsel %vm414, %v631, -inf
  %651 = vmax.xlane.f32.xlu0 %v650
  %v652 = vpop.xlane.xlu0 %651
  %v653 = vsel %vm414, %v634, -inf
  %654 = vmax.xlane.f32.xlu0 %v653
  %v655 = vpop.xlane.xlu0 %654
  %v656 = vsel %vm427, %v639, -inf
  %657 = vmax.xlane.f32.xlu0 %v656
  %v658 = vpop.xlane.xlu0 %657
  %v659 = vsub.f32 %v623, %v646
  %v660 = vsub.f32 %v626, %v649
  %v661 = vsub.f32 %v631, %v652
  %v662 = vsub.f32 %v634, %v655
  %v663 = vsub.f32 %v639, %v658
  %v664 = vmul.f32 %v659, 1.442695
  %v665 = vpow.pop %v664
  %v666 = vmul.f32 %v660, 1.442695
  %v667 = vpow.pop %v666
  %v668 = vmul.f32 %v661, 1.442695
  %v669 = vpow.pop %v668
  %v670 = vmul.f32 %v662, 1.442695
  %v671 = vpow.pop %v670
  %v672 = vmul.f32 %v663, 1.442695
  %v673 = vpow.pop %v672
  %v674 = vsel %vm414, %v665, 0.0
  %675 = vadd.xlane.f32.xlu0 %v674
  %v676 = vpop.xlane.xlu0 %675
  %v677 = vsel %vm414, %v667, 0.0
  %678 = vadd.xlane.f32.xlu0 %v677
  %v679 = vpop.xlane.xlu0 %678
  %v680 = vsel %vm414, %v669, 0.0
  %681 = vadd.xlane.f32.xlu0 %v680
  %v682 = vpop.xlane.xlu0 %681
  %v683 = vsel %vm414, %v671, 0.0
  %684 = vadd.xlane.f32.xlu0 %v683
  %v685 = vpop.xlane.xlu0 %684
  %v686 = vsel %vm427, %v673, 0.0
  %687 = vadd.xlane.f32.xlu0 %v686
  %v688 = vpop.xlane.xlu0 %687
  %v689 = vrcp.pop %v676
  %v690 = vrcp.pop %v679
  %v691 = vrcp.pop %v682
  %v692 = vrcp.pop %v685
  %v693 = vrcp.pop %v688
  %695 = vrot.lane.b32.xlu0 %v570, 64
  %v696 = vpop.permute.xlu0 %695
  %v698 = vmul.f32 %v231, %v696
  %v699 = vmul.f32 %v234, %v696
  %v700 = vmul.f32 %v239, %v696
  %v701 = vmul.f32 %v242, %v696
  %v702 = vmul.f32 %v247, %v696
  %v703 = vpack.c.bf16 %v699, %v698
  %v704 = vpack.c.bf16 %v701, %v700
  %v705 = vpack.c.bf16 %v702, %v702
  %v706 = vpack.c.bf16 %v667, %v665
  %v707 = vpack.c.bf16 %v671, %v669
  %v708 = vpack.c.bf16 %v673, %v673
  %712 = vrot.lane.b32.xlu0 %v703, 64
  %v713 = vpop.permute.xlu0 %712
  %714 = vrot.lane.b32.xlu0 %v704, 64
  %v715 = vpop.permute.xlu0 %714
  %716 = vrot.lane.b32.xlu0 %v705, 64
  %v717 = vpop.permute.xlu0 %716
  %v721 = vsel %vm414, %v706, 0
  %v724 = vsel %vm414, %v707, 0
  %v727 = vsel %vm414, %v708, 0
  %v730 = vsel %vm501, %v717, 0
  %732 = vmatprep.subr.bf16.mxu0 0
  %733 = vmatpush1.bf16.msra.mxu0 %v713
  %734 = vmatprep.subr.bf16.mxu0 0
  %735 = vmatpush1.bf16.msra.mxu0 %v715
  %736 = vmatprep.subr.bf16.mxu0 0
  %737 = vmatpush1.bf16.msra.mxu0 %v730
  %738 = vmatprep.subr.bf16.mxu0 0
  %739 = vmatpush1.bf16.msra.mxu0 0
  %740 = vmatprep.subr.bf16.mxu0 0
  %741 = vmatpush1.bf16.msra.mxu0 0
  %742 = vmatprep.subr.bf16.mxu0 0
  %743 = vmatpush1.bf16.msra.mxu0 0
  %744 = vmatprep.subr.bf16.mxu0 0
  %745 = vmatpush1.bf16.msra.mxu0 0
  %746 = vmatprep.subr.bf16.mxu0 0
  %747 = vmatpush1.bf16.msra.mxu0 0
  %748 = vmatprep.subr.bf16.mxu0 0
  %749 = vmatpush1.bf16.msra.mxu0 0
  %750 = vmatprep.subr.bf16.mxu0 0
  %751 = vmatpush1.bf16.msra.mxu0 0
  %752 = vmatprep.subr.bf16.mxu0 0
  %753 = vmatpush1.bf16.msra.mxu0 0
  %754 = vmatprep.subr.bf16.mxu0 0
  %755 = vmatpush1.bf16.msra.mxu0 0
  %756 = vmatprep.subr.bf16.mxu0 0
  %757 = vmatpush1.bf16.msra.mxu0 0
  %758 = vmatprep.subr.bf16.mxu0 0
  %759 = vmatpush1.bf16.msra.mxu0 0
  %760 = vmatprep.subr.bf16.mxu0 0
  %761 = vmatpush1.bf16.msra.mxu0 0
  %762 = vmatprep.subr.bf16.mxu0 0
  %763 = vmatpush1.bf16.msra.mxu0 0
  %764 = vmatprep.mubr.bf16.mxu0 0
  %765 = vmatmul.mubr.bf16.gmra.mrb[0].mxu0 %v721
  %v766 = vpop.f32.mrb[0].mxu0
  %v767 = vadd.f32 0.0, %v766
  %v768 = vpop.f32.mrb[0].mxu0
  %v769 = vpop.f32.mrb[0].mxu0
  %v770 = vadd.f32 0.0, %v769
  %v771 = vpop.f32.mrb[0].mxu0
  %772 = vmatprep.mubr.bf16.mxu0 0
  %773 = vmatmul.mubr.bf16.gmra.mrb[0].mxu0 %v724
  %v774 = vpop.f32.mrb[0].mxu0
  %v775 = vadd.f32 0.0, %v774
  %v776 = vpop.f32.mrb[0].mxu0
  %v777 = vpop.f32.mrb[0].mxu0
  %v778 = vadd.f32 0.0, %v777
  %v779 = vpop.f32.mrb[0].mxu0
  %780 = vmatprep.mubr.bf16.mxu0 0
  %781 = vmatmul.mubr.bf16.gmra.mrb[0].mxu0 %v727
  %v782 = vpop.f32.mrb[0].mxu0
  %v783 = vadd.f32 0.0, %v782
  %v784 = vpop.f32.mrb[0].mxu0
  %v785 = vpop.f32.mrb[0].mxu0
  %v786 = vpop.f32.mrb[0].mxu0
  %787 = vdwg.mxu0
  %v788 = vmul.f32 %v767, %v689
  %v789 = vmul.f32 %v770, %v690
  %v790 = vmul.f32 %v775, %v691
  %v791 = vmul.f32 %v778, %v692
  %v792 = vmul.f32 %v783, %v693
  %v793 = vadd.f32 %v561, %v788
  %v794 = vadd.f32 %v562, %v789
  %v795 = vadd.f32 %v563, %v790
  %v796 = vadd.f32 %v564, %v791
  %v797 = vadd.f32 %v565, %v792
  %vm798 = vcmp.ge.s32.totalorder %v262, 16
  %vm799 = vcmp.lt.s32.totalorder %v262, 24
  %vm800 = vmand %vm798, %vm799
  %v801 = vsel %vm800, 1, 0
  %v802 = vcvt.s32.f32 %v801
  %v803 = vmul.f32 %v231, %v802
  %v804 = vmul.f32 %v234, %v802
  %v805 = vmul.f32 %v239, %v802
  %v806 = vmul.f32 %v242, %v802
  %v807 = vmul.f32 %v247, %v802
  %v808 = vpack.c.bf16 %v804, %v803
  %v809 = vpack.c.bf16 %v806, %v805
  %v810 = vpack.c.bf16 %v807, %v807
  %v812 = vsel %vm34, %v808, 0
  %v815 = vsel %vm34, %v809, 0
  %v818 = vsel %vm34, %v810, 0
  %820 = vmatprep.subr.bf16.mxu0 0
  %821 = vmatpush1.bf16.xpose.msra.mxu0 %v350
  %822 = vmatprep.subr.bf16.mxu0 0
  %823 = vmatpush1.bf16.xpose.msra.mxu0 %v353
  %824 = vmatprep.subr.bf16.mxu0 0
  %825 = vmatpush1.bf16.xpose.msra.mxu0 %v356
  %826 = vmatprep.subr.bf16.mxu0 0
  %827 = vmatpush1.bf16.xpose.msra.mxu0 0
  %828 = vmatprep.subr.bf16.mxu0 0
  %829 = vmatpush1.bf16.xpose.msra.mxu0 0
  %830 = vmatprep.subr.bf16.mxu0 0
  %831 = vmatpush1.bf16.xpose.msra.mxu0 0
  %832 = vmatprep.subr.bf16.mxu0 0
  %833 = vmatpush1.bf16.xpose.msra.mxu0 0
  %834 = vmatprep.subr.bf16.mxu0 0
  %835 = vmatpush1.bf16.xpose.msra.mxu0 0
  %836 = vmatprep.subr.bf16.mxu0 0
  %837 = vmatpush1.bf16.xpose.msra.mxu0 0
  %838 = vmatprep.subr.bf16.mxu0 0
  %839 = vmatpush1.bf16.xpose.msra.mxu0 0
  %840 = vmatprep.subr.bf16.mxu0 0
  %841 = vmatpush1.bf16.xpose.msra.mxu0 0
  %842 = vmatprep.subr.bf16.mxu0 0
  %843 = vmatpush1.bf16.xpose.msra.mxu0 0
  %844 = vmatprep.subr.bf16.mxu0 0
  %845 = vmatpush1.bf16.xpose.msra.mxu0 0
  %846 = vmatprep.subr.bf16.mxu0 0
  %847 = vmatpush1.bf16.xpose.msra.mxu0 0
  %848 = vmatprep.subr.bf16.mxu0 0
  %849 = vmatpush1.bf16.xpose.msra.mxu0 0
  %850 = vmatprep.subr.bf16.mxu0 0
  %851 = vmatpush1.bf16.xpose.msra.mxu0 0
  %852 = vmatprep.mubr.bf16.mxu0 0
  %853 = vmatmul.mubr.bf16.gmra.mrb[0].mxu0 %v812
  %v854 = vpop.f32.mrb[0].mxu0
  %v855 = vadd.f32 %v314, %v854
  %v856 = vpop.f32.mrb[0].mxu0
  %v857 = vpop.f32.mrb[0].mxu0
  %v858 = vadd.f32 %v315, %v857
  %v859 = vpop.f32.mrb[0].mxu0
  %860 = vmatprep.mubr.bf16.mxu0 0
  %861 = vmatmul.mubr.bf16.gmra.mrb[0].mxu0 %v815
  %v862 = vpop.f32.mrb[0].mxu0
  %v863 = vadd.f32 %v316, %v862
  %v864 = vpop.f32.mrb[0].mxu0
  %v865 = vpop.f32.mrb[0].mxu0
  %v866 = vadd.f32 %v317, %v865
  %v867 = vpop.f32.mrb[0].mxu0
  %868 = vmatprep.mubr.bf16.mxu0 0
  %869 = vmatmul.mubr.bf16.gmra.mrb[0].mxu0 %v818
  %v870 = vpop.f32.mrb[0].mxu0
  %v871 = vadd.f32 %v318, %v870
  %v872 = vpop.f32.mrb[0].mxu0
  %v873 = vpop.f32.mrb[0].mxu0
  %v874 = vpop.f32.mrb[0].mxu0
  %875 = vdwg.mxu0
  %v876 = vsel %vm414, %v855, -inf
  %877 = vmax.xlane.f32.xlu0 %v876
  %v878 = vpop.xlane.xlu0 %877
  %v879 = vsel %vm414, %v858, -inf
  %880 = vmax.xlane.f32.xlu0 %v879
  %v881 = vpop.xlane.xlu0 %880
  %v882 = vsel %vm414, %v863, -inf
  %883 = vmax.xlane.f32.xlu0 %v882
  %v884 = vpop.xlane.xlu0 %883
  %v885 = vsel %vm414, %v866, -inf
  %886 = vmax.xlane.f32.xlu0 %v885
  %v887 = vpop.xlane.xlu0 %886
  %v888 = vsel %vm427, %v871, -inf
  %889 = vmax.xlane.f32.xlu0 %v888
  %v890 = vpop.xlane.xlu0 %889
  %v891 = vsub.f32 %v855, %v878
  %v892 = vsub.f32 %v858, %v881
  %v893 = vsub.f32 %v863, %v884
  %v894 = vsub.f32 %v866, %v887
  %v895 = vsub.f32 %v871, %v890
  %v896 = vmul.f32 %v891, 1.442695
  %v897 = vpow.pop %v896
  %v898 = vmul.f32 %v892, 1.442695
  %v899 = vpow.pop %v898
  %v900 = vmul.f32 %v893, 1.442695
  %v901 = vpow.pop %v900
  %v902 = vmul.f32 %v894, 1.442695
  %v903 = vpow.pop %v902
  %v904 = vmul.f32 %v895, 1.442695
  %v905 = vpow.pop %v904
  %v906 = vsel %vm414, %v897, 0.0
  %907 = vadd.xlane.f32.xlu0 %v906
  %v908 = vpop.xlane.xlu0 %907
  %v909 = vsel %vm414, %v899, 0.0
  %910 = vadd.xlane.f32.xlu0 %v909
  %v911 = vpop.xlane.xlu0 %910
  %v912 = vsel %vm414, %v901, 0.0
  %913 = vadd.xlane.f32.xlu0 %v912
  %v914 = vpop.xlane.xlu0 %913
  %v915 = vsel %vm414, %v903, 0.0
  %916 = vadd.xlane.f32.xlu0 %v915
  %v917 = vpop.xlane.xlu0 %916
  %v918 = vsel %vm427, %v905, 0.0
  %919 = vadd.xlane.f32.xlu0 %v918
  %v920 = vpop.xlane.xlu0 %919
  %v921 = vrcp.pop %v908
  %v922 = vrcp.pop %v911
  %v923 = vrcp.pop %v914
  %v924 = vrcp.pop %v917
  %v925 = vrcp.pop %v920
  %927 = vrot.lane.b32.xlu0 %v802, 64
  %v928 = vpop.permute.xlu0 %927
  %v930 = vmul.f32 %v231, %v928
  %v931 = vmul.f32 %v234, %v928
  %v932 = vmul.f32 %v239, %v928
  %v933 = vmul.f32 %v242, %v928
  %v934 = vmul.f32 %v247, %v928
  %v935 = vpack.c.bf16 %v931, %v930
  %v936 = vpack.c.bf16 %v933, %v932
  %v937 = vpack.c.bf16 %v934, %v934
  %v938 = vpack.c.bf16 %v899, %v897
  %v939 = vpack.c.bf16 %v903, %v901
  %v940 = vpack.c.bf16 %v905, %v905
  %944 = vrot.lane.b32.xlu0 %v935, 64
  %v945 = vpop.permute.xlu0 %944
  %946 = vrot.lane.b32.xlu0 %v936, 64
  %v947 = vpop.permute.xlu0 %946
  %948 = vrot.lane.b32.xlu0 %v937, 64
  %v949 = vpop.permute.xlu0 %948
  %v953 = vsel %vm414, %v938, 0
  %v956 = vsel %vm414, %v939, 0
  %v959 = vsel %vm414, %v940, 0
  %v962 = vsel %vm501, %v949, 0
  %964 = vmatprep.subr.bf16.mxu0 0
  %965 = vmatpush1.bf16.msra.mxu0 %v945
  %966 = vmatprep.subr.bf16.mxu0 0
  %967 = vmatpush1.bf16.msra.mxu0 %v947
  %968 = vmatprep.subr.bf16.mxu0 0
  %969 = vmatpush1.bf16.msra.mxu0 %v962
  %970 = vmatprep.subr.bf16.mxu0 0
  %971 = vmatpush1.bf16.msra.mxu0 0
  %972 = vmatprep.subr.bf16.mxu0 0
  %973 = vmatpush1.bf16.msra.mxu0 0
  %974 = vmatprep.subr.bf16.mxu0 0
  %975 = vmatpush1.bf16.msra.mxu0 0
  %976 = vmatprep.subr.bf16.mxu0 0
  %977 = vmatpush1.bf16.msra.mxu0 0
  %978 = vmatprep.subr.bf16.mxu0 0
  %979 = vmatpush1.bf16.msra.mxu0 0
  %980 = vmatprep.subr.bf16.mxu0 0
  %981 = vmatpush1.bf16.msra.mxu0 0
  %982 = vmatprep.subr.bf16.mxu0 0
  %983 = vmatpush1.bf16.msra.mxu0 0
  %984 = vmatprep.subr.bf16.mxu0 0
  %985 = vmatpush1.bf16.msra.mxu0 0
  %986 = vmatprep.subr.bf16.mxu0 0
  %987 = vmatpush1.bf16.msra.mxu0 0
  %988 = vmatprep.subr.bf16.mxu0 0
  %989 = vmatpush1.bf16.msra.mxu0 0
  %990 = vmatprep.subr.bf16.mxu0 0
  %991 = vmatpush1.bf16.msra.mxu0 0
  %992 = vmatprep.subr.bf16.mxu0 0
  %993 = vmatpush1.bf16.msra.mxu0 0
  %994 = vmatprep.subr.bf16.mxu0 0
  %995 = vmatpush1.bf16.msra.mxu0 0
  %996 = vmatprep.mubr.bf16.mxu0 0
  %997 = vmatmul.mubr.bf16.gmra.mrb[0].mxu0 %v953
  %v998 = vpop.f32.mrb[0].mxu0
  %v999 = vadd.f32 0.0, %v998
  %v1000 = vpop.f32.mrb[0].mxu0
  %v1001 = vpop.f32.mrb[0].mxu0
  %v1002 = vadd.f32 0.0, %v1001
  %v1003 = vpop.f32.mrb[0].mxu0
  %1004 = vmatprep.mubr.bf16.mxu0 0
  %1005 = vmatmul.mubr.bf16.gmra.mrb[0].mxu0 %v956
  %v1006 = vpop.f32.mrb[0].mxu0
  %v1007 = vadd.f32 0.0, %v1006
  %v1008 = vpop.f32.mrb[0].mxu0
  %v1009 = vpop.f32.mrb[0].mxu0
  %v1010 = vadd.f32 0.0, %v1009
  %v1011 = vpop.f32.mrb[0].mxu0
  %1012 = vmatprep.mubr.bf16.mxu0 0
  %1013 = vmatmul.mubr.bf16.gmra.mrb[0].mxu0 %v959
  %v1014 = vpop.f32.mrb[0].mxu0
  %v1015 = vadd.f32 0.0, %v1014
  %v1016 = vpop.f32.mrb[0].mxu0
  %v1017 = vpop.f32.mrb[0].mxu0
  %v1018 = vpop.f32.mrb[0].mxu0
  %1019 = vdwg.mxu0
  %v1020 = vmul.f32 %v999, %v921
  %v1021 = vmul.f32 %v1002, %v922
  %v1022 = vmul.f32 %v1007, %v923
  %v1023 = vmul.f32 %v1010, %v924
  %v1024 = vmul.f32 %v1015, %v925
  %v1025 = vadd.f32 %v793, %v1020
  %v1026 = vadd.f32 %v794, %v1021
  %v1027 = vadd.f32 %v795, %v1022
  %v1028 = vadd.f32 %v796, %v1023
  %v1029 = vadd.f32 %v797, %v1024
  %vm1030 = vcmp.ge.s32.totalorder %v262, 24
  %vm1031 = vcmp.lt.s32.totalorder %v262, 32
  %vm1032 = vmand %vm1030, %vm1031
  %v1033 = vsel %vm1032, 1, 0
  %v1034 = vcvt.s32.f32 %v1033
  %v1035 = vmul.f32 %v231, %v1034
  %v1036 = vmul.f32 %v234, %v1034
  %v1037 = vmul.f32 %v239, %v1034
  %v1038 = vmul.f32 %v242, %v1034
  %v1039 = vmul.f32 %v247, %v1034
  %v1040 = vpack.c.bf16 %v1036, %v1035
  %v1041 = vpack.c.bf16 %v1038, %v1037
  %v1042 = vpack.c.bf16 %v1039, %v1039
  %v1044 = vsel %vm34, %v1040, 0
  %v1047 = vsel %vm34, %v1041, 0
  %v1050 = vsel %vm34, %v1042, 0
  %1052 = vmatprep.subr.bf16.mxu0 0
  %1053 = vmatpush1.bf16.xpose.msra.mxu0 %v350
  %1054 = vmatprep.subr.bf16.mxu0 0
  %1055 = vmatpush1.bf16.xpose.msra.mxu0 %v353
  %1056 = vmatprep.subr.bf16.mxu0 0
  %1057 = vmatpush1.bf16.xpose.msra.mxu0 %v356
  %1058 = vmatprep.subr.bf16.mxu0 0
  %1059 = vmatpush1.bf16.xpose.msra.mxu0 0
  %1060 = vmatprep.subr.bf16.mxu0 0
  %1061 = vmatpush1.bf16.xpose.msra.mxu0 0
  %1062 = vmatprep.subr.bf16.mxu0 0
  %1063 = vmatpush1.bf16.xpose.msra.mxu0 0
  %1064 = vmatprep.subr.bf16.mxu0 0
  %1065 = vmatpush1.bf16.xpose.msra.mxu0 0
  %1066 = vmatprep.subr.bf16.mxu0 0
  %1067 = vmatpush1.bf16.xpose.msra.mxu0 0
  %1068 = vmatprep.subr.bf16.mxu0 0
  %1069 = vmatpush1.bf16.xpose.msra.mxu0 0
  %1070 = vmatprep.subr.bf16.mxu0 0
  %1071 = vmatpush1.bf16.xpose.msra.mxu0 0
  %1072 = vmatprep.subr.bf16.mxu0 0
  %1073 = vmatpush1.bf16.xpose.msra.mxu0 0
  %1074 = vmatprep.subr.bf16.mxu0 0
  %1075 = vmatpush1.bf16.xpose.msra.mxu0 0
  %1076 = vmatprep.subr.bf16.mxu0 0
  %1077 = vmatpush1.bf16.xpose.msra.mxu0 0
  %1078 = vmatprep.subr.bf16.mxu0 0
  %1079 = vmatpush1.bf16.xpose.msra.mxu0 0
  %1080 = vmatprep.subr.bf16.mxu0 0
  %1081 = vmatpush1.bf16.xpose.msra.mxu0 0
  %1082 = vmatprep.subr.bf16.mxu0 0
  %1083 = vmatpush1.bf16.xpose.msra.mxu0 0
  %1084 = vmatprep.mubr.bf16.mxu0 0
  %1085 = vmatmul.mubr.bf16.gmra.mrb[0].mxu0 %v1044
  %v1086 = vpop.f32.mrb[0].mxu0
  %v1087 = vadd.f32 %v314, %v1086
  %v1088 = vpop.f32.mrb[0].mxu0
  %v1089 = vpop.f32.mrb[0].mxu0
  %v1090 = vadd.f32 %v315, %v1089
  %v1091 = vpop.f32.mrb[0].mxu0
  %1092 = vmatprep.mubr.bf16.mxu0 0
  %1093 = vmatmul.mubr.bf16.gmra.mrb[0].mxu0 %v1047
  %v1094 = vpop.f32.mrb[0].mxu0
  %v1095 = vadd.f32 %v316, %v1094
  %v1096 = vpop.f32.mrb[0].mxu0
  %v1097 = vpop.f32.mrb[0].mxu0
  %v1098 = vadd.f32 %v317, %v1097
  %v1099 = vpop.f32.mrb[0].mxu0
  %1100 = vmatprep.mubr.bf16.mxu0 0
  %1101 = vmatmul.mubr.bf16.gmra.mrb[0].mxu0 %v1050
  %v1102 = vpop.f32.mrb[0].mxu0
  %v1103 = vadd.f32 %v318, %v1102
  %v1104 = vpop.f32.mrb[0].mxu0
  %v1105 = vpop.f32.mrb[0].mxu0
  %v1106 = vpop.f32.mrb[0].mxu0
  %1107 = vdwg.mxu0
  %v1108 = vsel %vm414, %v1087, -inf
  %1109 = vmax.xlane.f32.xlu0 %v1108
  %v1110 = vpop.xlane.xlu0 %1109
  %v1111 = vsel %vm414, %v1090, -inf
  %1112 = vmax.xlane.f32.xlu0 %v1111
  %v1113 = vpop.xlane.xlu0 %1112
  %v1114 = vsel %vm414, %v1095, -inf
  %1115 = vmax.xlane.f32.xlu0 %v1114
  %v1116 = vpop.xlane.xlu0 %1115
  %v1117 = vsel %vm414, %v1098, -inf
  %1118 = vmax.xlane.f32.xlu0 %v1117
  %v1119 = vpop.xlane.xlu0 %1118
  %v1120 = vsel %vm427, %v1103, -inf
  %1121 = vmax.xlane.f32.xlu0 %v1120
  %v1122 = vpop.xlane.xlu0 %1121
  %v1123 = vsub.f32 %v1087, %v1110
  %v1124 = vsub.f32 %v1090, %v1113
  %v1125 = vsub.f32 %v1095, %v1116
  %v1126 = vsub.f32 %v1098, %v1119
  %v1127 = vsub.f32 %v1103, %v1122
  %v1128 = vmul.f32 %v1123, 1.442695
  %v1129 = vpow.pop %v1128
  %v1130 = vmul.f32 %v1124, 1.442695
  %v1131 = vpow.pop %v1130
  %v1132 = vmul.f32 %v1125, 1.442695
  %v1133 = vpow.pop %v1132
  %v1134 = vmul.f32 %v1126, 1.442695
  %v1135 = vpow.pop %v1134
  %v1136 = vmul.f32 %v1127, 1.442695
  %v1137 = vpow.pop %v1136
  %v1138 = vsel %vm414, %v1129, 0.0
  %1139 = vadd.xlane.f32.xlu0 %v1138
  %v1140 = vpop.xlane.xlu0 %1139
  %v1141 = vsel %vm414, %v1131, 0.0
  %1142 = vadd.xlane.f32.xlu0 %v1141
  %v1143 = vpop.xlane.xlu0 %1142
  %v1144 = vsel %vm414, %v1133, 0.0
  %1145 = vadd.xlane.f32.xlu0 %v1144
  %v1146 = vpop.xlane.xlu0 %1145
  %v1147 = vsel %vm414, %v1135, 0.0
  %1148 = vadd.xlane.f32.xlu0 %v1147
  %v1149 = vpop.xlane.xlu0 %1148
  %v1150 = vsel %vm427, %v1137, 0.0
  %1151 = vadd.xlane.f32.xlu0 %v1150
  %v1152 = vpop.xlane.xlu0 %1151
  %v1153 = vrcp.pop %v1140
  %v1154 = vrcp.pop %v1143
  %v1155 = vrcp.pop %v1146
  %v1156 = vrcp.pop %v1149
  %v1157 = vrcp.pop %v1152
  %1159 = vrot.lane.b32.xlu0 %v1034, 64
  %v1160 = vpop.permute.xlu0 %1159
  %v1162 = vmul.f32 %v231, %v1160
  %v1163 = vmul.f32 %v234, %v1160
  %v1164 = vmul.f32 %v239, %v1160
  %v1165 = vmul.f32 %v242, %v1160
  %v1166 = vmul.f32 %v247, %v1160
  %v1167 = vpack.c.bf16 %v1163, %v1162
  %v1168 = vpack.c.bf16 %v1165, %v1164
  %v1169 = vpack.c.bf16 %v1166, %v1166
  %v1170 = vpack.c.bf16 %v1131, %v1129
  %v1171 = vpack.c.bf16 %v1135, %v1133
  %v1172 = vpack.c.bf16 %v1137, %v1137
  %1176 = vrot.lane.b32.xlu0 %v1167, 64
  %v1177 = vpop.permute.xlu0 %1176
  %1178 = vrot.lane.b32.xlu0 %v1168, 64
  %v1179 = vpop.permute.xlu0 %1178
  %1180 = vrot.lane.b32.xlu0 %v1169, 64
  %v1181 = vpop.permute.xlu0 %1180
  %v1185 = vsel %vm414, %v1170, 0
  %v1188 = vsel %vm414, %v1171, 0
  %v1191 = vsel %vm414, %v1172, 0
  %v1194 = vsel %vm501, %v1181, 0
  %1196 = vmatprep.subr.bf16.mxu0 0
  %1197 = vmatpush1.bf16.msra.mxu0 %v1177
  %1198 = vmatprep.subr.bf16.mxu0 0
  %1199 = vmatpush1.bf16.msra.mxu0 %v1179
  %1200 = vmatprep.subr.bf16.mxu0 0
  %1201 = vmatpush1.bf16.msra.mxu0 %v1194
  %1202 = vmatprep.subr.bf16.mxu0 0
  %1203 = vmatpush1.bf16.msra.mxu0 0
  %1204 = vmatprep.subr.bf16.mxu0 0
  %1205 = vmatpush1.bf16.msra.mxu0 0
  %1206 = vmatprep.subr.bf16.mxu0 0
  %1207 = vmatpush1.bf16.msra.mxu0 0
  %1208 = vmatprep.subr.bf16.mxu0 0
  %1209 = vmatpush1.bf16.msra.mxu0 0
  %1210 = vmatprep.subr.bf16.mxu0 0
  %1211 = vmatpush1.bf16.msra.mxu0 0
  %1212 = vmatprep.subr.bf16.mxu0 0
  %1213 = vmatpush1.bf16.msra.mxu0 0
  %1214 = vmatprep.subr.bf16.mxu0 0
  %1215 = vmatpush1.bf16.msra.mxu0 0
  %1216 = vmatprep.subr.bf16.mxu0 0
  %1217 = vmatpush1.bf16.msra.mxu0 0
  %1218 = vmatprep.subr.bf16.mxu0 0
  %1219 = vmatpush1.bf16.msra.mxu0 0
  %1220 = vmatprep.subr.bf16.mxu0 0
  %1221 = vmatpush1.bf16.msra.mxu0 0
  %1222 = vmatprep.subr.bf16.mxu0 0
  %1223 = vmatpush1.bf16.msra.mxu0 0
  %1224 = vmatprep.subr.bf16.mxu0 0
  %1225 = vmatpush1.bf16.msra.mxu0 0
  %1226 = vmatprep.subr.bf16.mxu0 0
  %1227 = vmatpush1.bf16.msra.mxu0 0
  %1228 = vmatprep.mubr.bf16.mxu0 0
  %1229 = vmatmul.mubr.bf16.gmra.mrb[0].mxu0 %v1185
  %v1230 = vpop.f32.mrb[0].mxu0
  %v1231 = vadd.f32 0.0, %v1230
  %v1232 = vpop.f32.mrb[0].mxu0
  %v1233 = vpop.f32.mrb[0].mxu0
  %v1234 = vadd.f32 0.0, %v1233
  %v1235 = vpop.f32.mrb[0].mxu0
  %1236 = vmatprep.mubr.bf16.mxu0 0
  %1237 = vmatmul.mubr.bf16.gmra.mrb[0].mxu0 %v1188
  %v1238 = vpop.f32.mrb[0].mxu0
  %v1239 = vadd.f32 0.0, %v1238
  %v1240 = vpop.f32.mrb[0].mxu0
  %v1241 = vpop.f32.mrb[0].mxu0
  %v1242 = vadd.f32 0.0, %v1241
  %v1243 = vpop.f32.mrb[0].mxu0
  %1244 = vmatprep.mubr.bf16.mxu0 0
  %1245 = vmatmul.mubr.bf16.gmra.mrb[0].mxu0 %v1191
  %v1246 = vpop.f32.mrb[0].mxu0
  %v1247 = vadd.f32 0.0, %v1246
  %v1248 = vpop.f32.mrb[0].mxu0
  %v1249 = vpop.f32.mrb[0].mxu0
  %v1250 = vpop.f32.mrb[0].mxu0
  %1251 = vdwg.mxu0
  %v1252 = vmul.f32 %v1231, %v1153
  %v1253 = vmul.f32 %v1234, %v1154
  %v1254 = vmul.f32 %v1239, %v1155
  %v1255 = vmul.f32 %v1242, %v1156
  %v1256 = vmul.f32 %v1247, %v1157
  %v1257 = vadd.f32 %v1025, %v1252
  %v1258 = vadd.f32 %v1026, %v1253
  %v1259 = vadd.f32 %v1027, %v1254
  %v1260 = vadd.f32 %v1028, %v1255
  %v1261 = vadd.f32 %v1029, %v1256
  %v1262 = vpack.c.bf16 %v1258, %v1257
  %v1263 = vpack.c.bf16 %v1260, %v1259
  %v1264 = vpack.c.bf16 %v1261, %v1261
  %v1265 = vld [vmem:[%s3] sm:$0xf]
  %v1266 = vld [vmem:[%s3 + $0x4] sm:$0xf]
  %v1267 = vld [vmem:[%s3 + $0x8] sm:$0xf]
  %v1268 = vld [vmem:[%s3 + $0xc] sm:$0xf]
  %v1273 = vunpack.c.l.b16 %v1265
  %v1274 = vunpack.c.l.b16 %v1266
  %v1275 = vunpack.c.l.b16 %v1267
  %v1276 = vunpack.c.l.b16 %v1268
  %v1277 = vpack.c.b16 %v1274, %v1273
  %v1278 = vpack.c.b16 %v1276, %v1275
  %v1280 = vsel %vm34, %v1262, 0
  %v1283 = vsel %vm34, %v1263, 0
  %v1286 = vsel %vm34, %v1264, 0
  %v1289 = vsel %vm34, %v1277, 0
  %v1292 = vsel %vm34, %v1278, 0
  %1294 = vmatprep.subr.bf16.mxu0 0
  %1295 = vmatpush1.bf16.xpose.msra.mxu0 %v1289
  %1296 = vmatprep.subr.bf16.mxu0 0
  %1297 = vmatpush1.bf16.xpose.msra.mxu0 %v1292
  %1298 = vmatprep.subr.bf16.mxu0 0
  %1299 = vmatpush1.bf16.xpose.msra.mxu0 0
  %1300 = vmatprep.subr.bf16.mxu0 0
  %1301 = vmatpush1.bf16.xpose.msra.mxu0 0
  %1302 = vmatprep.subr.bf16.mxu0 0
  %1303 = vmatpush1.bf16.xpose.msra.mxu0 0
  %1304 = vmatprep.subr.bf16.mxu0 0
  %1305 = vmatpush1.bf16.xpose.msra.mxu0 0
  %1306 = vmatprep.subr.bf16.mxu0 0
  %1307 = vmatpush1.bf16.xpose.msra.mxu0 0
  %1308 = vmatprep.subr.bf16.mxu0 0
  %1309 = vmatpush1.bf16.xpose.msra.mxu0 0
  %1310 = vmatprep.subr.bf16.mxu0 0
  %1311 = vmatpush1.bf16.xpose.msra.mxu0 0
  %1312 = vmatprep.subr.bf16.mxu0 0
  %1313 = vmatpush1.bf16.xpose.msra.mxu0 0
  %1314 = vmatprep.subr.bf16.mxu0 0
  %1315 = vmatpush1.bf16.xpose.msra.mxu0 0
  %1316 = vmatprep.subr.bf16.mxu0 0
  %1317 = vmatpush1.bf16.xpose.msra.mxu0 0
  %1318 = vmatprep.subr.bf16.mxu0 0
  %1319 = vmatpush1.bf16.xpose.msra.mxu0 0
  %1320 = vmatprep.subr.bf16.mxu0 0
  %1321 = vmatpush1.bf16.xpose.msra.mxu0 0
  %1322 = vmatprep.subr.bf16.mxu0 0
  %1323 = vmatpush1.bf16.xpose.msra.mxu0 0
  %1324 = vmatprep.subr.bf16.mxu0 0
  %1325 = vmatpush1.bf16.xpose.msra.mxu0 0
  %1326 = vmatprep.mubr.bf16.mxu0 0
  %1327 = vmatmul.mubr.bf16.gmra.mrb[0].mxu0 %v1280
  %v1328 = vpop.f32.mrb[0].mxu0
  %v1329 = vadd.f32 0.0, %v1328
  %v1330 = vpop.f32.mrb[0].mxu0
  %v1331 = vpop.f32.mrb[0].mxu0
  %v1332 = vadd.f32 0.0, %v1331
  %v1333 = vpop.f32.mrb[0].mxu0
  %1334 = vmatprep.mubr.bf16.mxu0 0
  %1335 = vmatmul.mubr.bf16.gmra.mrb[0].mxu0 %v1283
  %v1336 = vpop.f32.mrb[0].mxu0
  %v1337 = vadd.f32 0.0, %v1336
  %v1338 = vpop.f32.mrb[0].mxu0
  %v1339 = vpop.f32.mrb[0].mxu0
  %v1340 = vadd.f32 0.0, %v1339
  %v1341 = vpop.f32.mrb[0].mxu0
  %1342 = vmatprep.mubr.bf16.mxu0 0
  %1343 = vmatmul.mubr.bf16.gmra.mrb[0].mxu0 %v1286
  %v1344 = vpop.f32.mrb[0].mxu0
  %v1345 = vadd.f32 0.0, %v1344
  %v1346 = vpop.f32.mrb[0].mxu0
  %v1347 = vpop.f32.mrb[0].mxu0
  %v1348 = vpop.f32.mrb[0].mxu0
  %1349 = vdwg.mxu0
  %v1350 = vpack.c.bf16 %v1332, %v1329
  %v1351 = vpack.c.bf16 %v1340, %v1337
  %v1352 = vpack.c.bf16 %v1345, %v1345
  %v1353 = vld [vmem:[%s4] sm:$0xf]
  %v1354 = vlaneseq
  %v1355 = vshrl.u32 %v1354, 7
  %v1356 = vsub.s32 0, %v1355
  %v1357 = vrot.slane %v27, %v1356
  %v1359 = vsel %vm34, %v1350, 0
  %v1362 = vsel %vm34, %v1351, 0
  %v1365 = vsel %vm34, %v1352, 0
  %v1368 = vsel %vm34, %v1353, 0
  %1370 = vmatprep.subr.bf16.mxu0 0
  %1371 = vmatpush1.bf16.xpose.msra.mxu0 %v1368
  %1372 = vmatprep.subr.bf16.mxu0 0
  %1373 = vmatpush1.bf16.xpose.msra.mxu0 0
  %1374 = vmatprep.subr.bf16.mxu0 0
  %1375 = vmatpush1.bf16.xpose.msra.mxu0 0
  %1376 = vmatprep.subr.bf16.mxu0 0
  %1377 = vmatpush1.bf16.xpose.msra.mxu0 0
  %1378 = vmatprep.subr.bf16.mxu0 0
  %1379 = vmatpush1.bf16.xpose.msra.mxu0 0
  %1380 = vmatprep.subr.bf16.mxu0 0
  %1381 = vmatpush1.bf16.xpose.msra.mxu0 0
  %1382 = vmatprep.subr.bf16.mxu0 0
  %1383 = vmatpush1.bf16.xpose.msra.mxu0 0
  %1384 = vmatprep.subr.bf16.mxu0 0
  %1385 = vmatpush1.bf16.xpose.msra.mxu0 0
  %1386 = vmatprep.subr.bf16.mxu0 0
  %1387 = vmatpush1.bf16.xpose.msra.mxu0 0
  %1388 = vmatprep.subr.bf16.mxu0 0
  %1389 = vmatpush1.bf16.xpose.msra.mxu0 0
  %1390 = vmatprep.subr.bf16.mxu0 0
  %1391 = vmatpush1.bf16.xpose.msra.mxu0 0
  %1392 = vmatprep.subr.bf16.mxu0 0
  %1393 = vmatpush1.bf16.xpose.msra.mxu0 0
  %1394 = vmatprep.subr.bf16.mxu0 0
  %1395 = vmatpush1.bf16.xpose.msra.mxu0 0
  %1396 = vmatprep.subr.bf16.mxu0 0
  %1397 = vmatpush1.bf16.xpose.msra.mxu0 0
  %1398 = vmatprep.subr.bf16.mxu0 0
  %1399 = vmatpush1.bf16.xpose.msra.mxu0 0
  %1400 = vmatprep.subr.bf16.mxu0 0
  %1401 = vmatpush1.bf16.xpose.msra.mxu0 0
  %1402 = vmatprep.mubr.bf16.mxu0 0
  %1403 = vmatmul.mubr.bf16.gmra.mrb[0].mxu0 %v1359
  %v1404 = vpop.f32.mrb[0].mxu0
  %v1405 = vadd.f32 %v1357, %v1404
  %v1406 = vpop.f32.mrb[0].mxu0
  %v1407 = vpop.f32.mrb[0].mxu0
  %v1408 = vadd.f32 %v1357, %v1407
  %v1409 = vpop.f32.mrb[0].mxu0
  %1410 = vmatprep.mubr.bf16.mxu0 0
  %1411 = vmatmul.mubr.bf16.gmra.mrb[0].mxu0 %v1362
  %v1412 = vpop.f32.mrb[0].mxu0
  %v1413 = vadd.f32 %v1357, %v1412
  %v1414 = vpop.f32.mrb[0].mxu0
  %v1415 = vpop.f32.mrb[0].mxu0
  %v1416 = vadd.f32 %v1357, %v1415
  %v1417 = vpop.f32.mrb[0].mxu0
  %1418 = vmatprep.mubr.bf16.mxu0 0
  %1419 = vmatmul.mubr.bf16.gmra.mrb[0].mxu0 %v1365
  %v1420 = vpop.f32.mrb[0].mxu0
  %v1421 = vadd.f32 %v1357, %v1420
  %v1422 = vpop.f32.mrb[0].mxu0
  %v1423 = vpop.f32.mrb[0].mxu0
  %v1424 = vpop.f32.mrb[0].mxu0
  %1425 = vdwg.mxu0
  %v1426 = vmax.f32 %v1405, 0.0
  %v1427 = vmax.f32 %v1408, 0.0
  %v1428 = vmax.f32 %v1413, 0.0
  %v1429 = vmax.f32 %v1416, 0.0
  %v1430 = vmax.f32 %v1421, 0.0
  %v1431 = vpack.c.bf16 %v1427, %v1426
  %v1432 = vpack.c.bf16 %v1429, %v1428
  %v1433 = vpack.c.bf16 %v1430, %v1430
  %v1434 = vld [vmem:[%s5] sm:$0xf]
  %v1435 = vld [vmem:[%s5 + $0x4] sm:$0xf]
  %v1436 = vld [vmem:[%s5 + $0x8] sm:$0xf]
  %v1437 = vld [vmem:[%s5 + $0xc] sm:$0xf]
  %v1438 = vlaneseq
  %v1439 = vshrl.u32 %v1438, 7
  %v1440 = vsub.s32 0, %v1439
  %v1441 = vrot.slane %v28, %v1440
  %v1446 = vunpack.c.l.b16 %v1434
  %v1447 = vunpack.c.l.b16 %v1435
  %v1448 = vunpack.c.l.b16 %v1436
  %v1449 = vunpack.c.l.b16 %v1437
  %v1450 = vpack.c.b16 %v1447, %v1446
  %v1451 = vpack.c.b16 %v1449, %v1448
  %vm1452 = vcmask 64512
  %v1454 = vsel %vm1452, %v1431, 0
  %v1457 = vsel %vm1452, %v1432, 0
  %v1460 = vsel %vm1452, %v1433, 0
  %v1463 = vsel %vm1452, %v1450, 0
  %v1466 = vsel %vm1452, %v1451, 0
  %1468 = vmatprep.subr.bf16.mxu0 0
  %1469 = vmatpush1.bf16.xpose.msra.mxu0 %v1463
  %1470 = vmatprep.subr.bf16.mxu0 0
  %1471 = vmatpush1.bf16.xpose.msra.mxu0 %v1466
  %1472 = vmatprep.subr.bf16.mxu0 0
  %1473 = vmatpush1.bf16.xpose.msra.mxu0 0
  %1474 = vmatprep.subr.bf16.mxu0 0
  %1475 = vmatpush1.bf16.xpose.msra.mxu0 0
  %1476 = vmatprep.subr.bf16.mxu0 0
  %1477 = vmatpush1.bf16.xpose.msra.mxu0 0
  %1478 = vmatprep.subr.bf16.mxu0 0
  %1479 = vmatpush1.bf16.xpose.msra.mxu0 0
  %1480 = vmatprep.subr.bf16.mxu0 0
  %1481 = vmatpush1.bf16.xpose.msra.mxu0 0
  %1482 = vmatprep.subr.bf16.mxu0 0
  %1483 = vmatpush1.bf16.xpose.msra.mxu0 0
  %1484 = vmatprep.subr.bf16.mxu0 0
  %1485 = vmatpush1.bf16.xpose.msra.mxu0 0
  %1486 = vmatprep.subr.bf16.mxu0 0
  %1487 = vmatpush1.bf16.xpose.msra.mxu0 0
  %1488 = vmatprep.subr.bf16.mxu0 0
  %1489 = vmatpush1.bf16.xpose.msra.mxu0 0
  %1490 = vmatprep.subr.bf16.mxu0 0
  %1491 = vmatpush1.bf16.xpose.msra.mxu0 0
  %1492 = vmatprep.subr.bf16.mxu0 0
  %1493 = vmatpush1.bf16.xpose.msra.mxu0 0
  %1494 = vmatprep.subr.bf16.mxu0 0
  %1495 = vmatpush1.bf16.xpose.msra.mxu0 0
  %1496 = vmatprep.subr.bf16.mxu0 0
  %1497 = vmatpush1.bf16.xpose.msra.mxu0 0
  %1498 = vmatprep.subr.bf16.mxu0 0
  %1499 = vmatpush1.bf16.xpose.msra.mxu0 0
  %1500 = vmatprep.mubr.bf16.mxu0 0
  %1501 = vmatmul.mubr.bf16.gmra.mrb[0].mxu0 %v1454
  %v1502 = vpop.f32.mrb[0].mxu0
  %v1503 = vadd.f32 %v1441, %v1502
  %v1504 = vpop.f32.mrb[0].mxu0
  %v1505 = vpop.f32.mrb[0].mxu0
  %v1506 = vadd.f32 %v1441, %v1505
  %v1507 = vpop.f32.mrb[0].mxu0
  %1508 = vmatprep.mubr.bf16.mxu0 0
  %1509 = vmatmul.mubr.bf16.gmra.mrb[0].mxu0 %v1457
  %v1510 = vpop.f32.mrb[0].mxu0
  %v1511 = vadd.f32 %v1441, %v1510
  %v1512 = vpop.f32.mrb[0].mxu0
  %v1513 = vpop.f32.mrb[0].mxu0
  %v1514 = vadd.f32 %v1441, %v1513
  %v1515 = vpop.f32.mrb[0].mxu0
  %1516 = vmatprep.mubr.bf16.mxu0 0
  %1517 = vmatmul.mubr.bf16.gmra.mrb[0].mxu0 %v1460
  %v1518 = vpop.f32.mrb[0].mxu0
  %v1519 = vadd.f32 %v1441, %v1518
  %v1520 = vpop.f32.mrb[0].mxu0
  %v1521 = vpop.f32.mrb[0].mxu0
  %v1522 = vpop.f32.mrb[0].mxu0
  %1523 = vdwg.mxu0
  %v1524 = vadd.f32 %v1329, %v1503
  %v1525 = vadd.f32 %v1332, %v1506
  %v1526 = vadd.f32 %v1337, %v1511
  %v1527 = vadd.f32 %v1340, %v1514
  %v1528 = vadd.f32 %v1345, %v1519
  %1529 = vst.msk [vmem:[%s6] sm:$0xff] %vm34, %v1524
  %1530 = vst.msk [vmem:[%s6 + $0x8] sm:$0xff] %vm34, %v1525
  %1531 = vst.msk [vmem:[%s6 + $0x10] sm:$0xff] %vm34, %v1526
  %1532 = vst.msk [vmem:[%s6 + $0x18] sm:$0xff] %vm34, %v1527
  %1533 = vst.msk [vmem:[%s6 + $0x20] sm:$0x3] %vm47, %v1528
  // Predicated region
  $region26: #{tpu_custom_call.1} parent=0 // pred_check
    _
  $region27: #{tpu_custom_call.1} parent=0 // pred_check_branch
    %1535 = sbr.rel (0) target = $region29
  $region28: #{tpu_custom_call.1} parent=0 // pred_region
    _
  $region29: #{tpu_custom_call.1} parent=0 // pred_fallthru
    _
  // Predicated region
  $region30: #{tpu_custom_call.1} parent=0 // pred_check
    _
  $region31: #{tpu_custom_call.1} parent=0 // pred_check_branch
    %1537 = sbr.rel (0) target = $region33
  $region32: #{tpu_custom_call.1} parent=0 // pred_region
    _
  $region33: #{tpu_custom_call.1} parent=0 // pred_fallthru
    _

</llo_original>
